<compile_context>
chip_gen: v6e
topology: v6e:2x2x1
jax: 0.10.0
libtpu: 0.0.40
codegen_flags: <defaults>
</compile_context>

<pallas_src>
import math

import jax
import jax.numpy as jnp
import numpy as np
from jax import lax
from jax.experimental import pallas as pl
from jax.experimental.pallas import tpu as pltpu


# ----------------------------- kernel factory ------------------------------ #
def _make_kernel(tile_t, last_count, n_blocks, f_pad):
    def kernel(x_ref, wih_ref, b_ref, whh_ref, wfc_ref, bfc_ref,
               h0_ref, c0_ref, out_ref,
               xg_s, hblk_s, h_s, c_s):
        blk = pl.program_id(0)

        # Seed recurrent state on the first time block.
        @pl.when(blk == 0)
        def _():
            h_s[...] = h0_ref[...]
            c_s[...] = c0_ref[...]

        # Hoisted input projection for the whole block (one MXU matmul):
        #   (tile_t, 6F) @ (6F, 4*F_PAD) + (1, 4*F_PAD)
        xg_s[...] = (jnp.dot(x_ref[...], wih_ref[...],
                             preferred_element_type=jnp.float32) + b_ref[...])

        whh = whh_ref[...]          # (F_PAD, 4*F_PAD), gate-tiled
        FP = f_pad

        def run_steps(nsteps):
            def step(t, carry):
                h, c = carry
                # Only the genuinely sequential part lives in the loop.
                zg = xg_s[pl.ds(t, 1), :] + jnp.dot(
                    h, whh, preferred_element_type=jnp.float32)
                # One EUP pass over all four gates (g pre-scaled by 2 at
                # param-prep time, so tanh(z_g) == 2*sigmoid(2*z_g) - 1).
                s = jax.nn.sigmoid(zg)
                i_g = s[:, 0 * FP:1 * FP]
                f_g = s[:, 1 * FP:2 * FP]
                g_g = 2.0 * s[:, 2 * FP:3 * FP] - 1.0
                o_g = s[:, 3 * FP:4 * FP]
                c_new = f_g * c + i_g * g_g
                h_new = o_g * jnp.tanh(c_new)
                hblk_s[pl.ds(t, 1), :] = h_new      # FC head hoisted out
                return h_new, c_new

            h, c = lax.fori_loop(0, nsteps, step, (h_s[...], c_s[...]),
                                 unroll=True if nsteps <= 64 else 16)
            h_s[...] = h
            c_s[...] = c

        if last_count == tile_t:        # all blocks full (trace-time branch)
            run_steps(tile_t)
        else:
            @pl.when(blk < n_blocks - 1)
            def _():
                run_steps(tile_t)

            @pl.when(blk == n_blocks - 1)
            def _():
                run_steps(last_count)   # no wasted serial steps on padding

        # FC head (Linear + Sigmoid) for the whole block: one batched MXU
        # matmul + one sigmoid + one lane-dense, unmasked full-block store.
        y = jnp.dot(hblk_s[...], wfc_ref[...],
                    preferred_element_type=jnp.float32) + bfc_ref[...]
        out_ref[...] = jax.nn.sigmoid(y)

    return kernel


# ------------------------------ wrapper ------------------------------------ #
def _time_tile(T, cap=256):
    """Time-block size: multiple of 8, capped. Larger blocks amortize the
    per-grid-step overhead and the hoisted X@Wih / FC matmuls."""
    if T <= cap:
        return max(8, ((T + 7) // 8) * 8)
    return cap


def _gate_tile(w, feats, f_pad):
    """(in, 4*feats), gates i|f|g|o fused along lanes -> (in, 4*f_pad) with
    each gate in its own f_pad-lane tile.  The g-gate columns are scaled by
    2 so that tanh(z_g) == 2*sigmoid(2*z_g) - 1 (single-sigmoid gate trick).
    Padded lanes are zero -> sigmoid(0)=0.5, g=0, so padded h/c stay 0."""
    in_dim = w.shape[0]
    out = jnp.zeros((in_dim, 4 * f_pad), jnp.float32)
    for g in range(4):
        blk = w[:, g * feats:(g + 1) * feats]
        if g == 2:
            blk = blk * 2.0
        out = out.at[:, g * f_pad:g * f_pad + feats].set(blk)
    return out


def lstm_ad_forward(x, params, max_tile_t=256):
    T, in_dim = x.shape
    feats = params["whh2"].shape[0]
    f_pad = ((feats + 127) // 128) * 128          # lane-dense gate/output tile
    tile_t = _time_tile(T, max_tile_t)
    n_blocks = max(1, -(-T // tile_t))
    t_pad = n_blocks * tile_t
    last_count = T - (n_blocks - 1) * tile_t      # valid steps in last block

    # --- gate-tiled / padded parameters (layout plumbing, done once) ---
    wih_gt = _gate_tile(params["wih2"], feats, f_pad)                 # (6F, 4*F_PAD)
    whh_gt = jnp.pad(_gate_tile(params["whh2"], feats, f_pad),
                     ((0, f_pad - feats), (0, 0)))                    # (F_PAD, 4*F_PAD)
    b_gt = _gate_tile(params["b2"], feats, f_pad)                     # (1, 4*F_PAD)
    wfc_pad = jnp.pad(params["wfc"],
                      ((0, f_pad - feats), (0, f_pad - feats)))       # (F_PAD, F_PAD)
    bfc_pad = jnp.pad(params["bfc"], ((0, 0), (0, f_pad - feats)))    # (1, F_PAD)
    h0_pad = jnp.pad(params["h02"], ((0, 0), (0, f_pad - feats)))     # (1, F_PAD)
    c0_pad = jnp.pad(params["c02"], ((0, 0), (0, f_pad - feats)))     # (1, F_PAD)

    x_pad = x if t_pad == T else jnp.pad(x, ((0, t_pad - T), (0, 0)))

    # Loop-invariant inputs (weights, biases, h0/c0): constant index maps.
    # TODO(synk): for large feats, single-buffer the weights and/or store
    # them in bf16 (v7x 64 MiB VMEM); negligible at feats=8 so kept f32 here.
    def full_spec(a):
        n = a.ndim
        return pl.BlockSpec(a.shape, lambda i, _n=n: (0,) * _n)

    grid_spec = pltpu.PrefetchScalarGridSpec(
        num_scalar_prefetch=0,
        grid=(n_blocks,),
        in_specs=[
            pl.BlockSpec((tile_t, in_dim), lambda i: (i, 0)),   # x time block
            full_spec(wih_gt), full_spec(b_gt), full_spec(whh_gt),
            full_spec(wfc_pad), full_spec(bfc_pad),
            full_spec(h0_pad), full_spec(c0_pad),
        ],
        out_specs=pl.BlockSpec((tile_t, f_pad), lambda i: (i, 0)),
        scratch_shapes=[
            pltpu.VMEM((tile_t, 4 * f_pad), jnp.float32),  # hoisted gate pre-acts
            pltpu.VMEM((tile_t, f_pad), jnp.float32),      # per-block h slab (FC input)
            pltpu.VMEM((1, f_pad), jnp.float32),           # h carry
            pltpu.VMEM((1, f_pad), jnp.float32),           # c carry
        ],
    )

    out = pl.pallas_call(
        _make_kernel(tile_t, last_count, n_blocks, f_pad),
        out_shape=jax.ShapeDtypeStruct((t_pad, f_pad), jnp.float32),
        grid_spec=grid_spec,
        compiler_params=pltpu.CompilerParams(
            dimension_semantics=("arbitrary",)),   # true time recurrence
    )(x_pad, wih_gt, b_gt, whh_gt, wfc_pad, bfc_pad, h0_pad, c0_pad)

    # Slice off lane / time padding, view as (T, 1, feats).
    return out[:T, :feats].reshape(T, 1, feats)


# --------------------- deterministic parameter init ------------------------ #
def init_params(key, feats):
    in_dim = 6 * feats
    k2 = 1.0 / math.sqrt(feats)
    ks = jax.random.split(key, 8)

    def u(k, shape, bound):
        return jax.random.uniform(k, shape, jnp.float32, -bound, bound)

    return dict(
        # gate-fused (i|f|g|o along last axis), transposed to (in, 4*out)
        wih2=u(ks[0], (in_dim, 4 * feats), k2),
        whh2=u(ks[1], (feats, 4 * feats), k2),
        b2=u(ks[2], (1, 4 * feats), k2) + u(ks[3], (1, 4 * feats), k2),  # b_ih+b_hh
        wfc=u(ks[4], (feats, feats), k2),   # Linear weight, transposed to (in, out)
        bfc=u(ks[5], (1, feats), k2),
        h02=jax.random.uniform(ks[6], (1, feats), jnp.float32),   # torch.rand
        c02=jax.random.normal(ks[7], (1, feats), jnp.float32),    # torch.randn
    )


# ------------------------- pure-JAX reference ------------------------------ #
def ref_forward(x, params):
    feats = params["whh2"].shape[0]
    wih, whh, b = params["wih2"], params["whh2"], params["b2"]
    h, c = params["h02"], params["c02"]
    outs = []
    for t in range(x.shape[0]):
        xt = x[t:t + 1]
        z = (xt @ wih + b) + h @ whh
        i_g = jax.nn.sigmoid(z[:, :feats])
        f_g = jax.nn.sigmoid(z[:, feats:2 * feats])
        g_g = jnp.tanh(z[:, 2 * feats:3 * feats])
        o_g = jax.nn.sigmoid(z[:, 3 * feats:])
        c = f_g * c + i_g * g_g
        h = o_g * jnp.tanh(c)
        outs.append(jax.nn.sigmoid(h @ params["wfc"] + params["bfc"]))
    return jnp.stack(outs, axis=0)   # (T, 1, feats)


if __name__ == "__main__":
    key = jax.random.PRNGKey(0)
    kx, kp, kx2 = jax.random.split(key, 3)

    feats = 8                      # small n_feats
    params = init_params(kp, feats)

    # Case 1: small sequence, single full time block.
    T = 8
    x = jax.random.normal(kx, (T, 6 * feats), jnp.float32)
    out = jax.block_until_ready(lstm_ad_forward(x, params))
    assert out.shape == (T, 1, feats), out.shape
    np.testing.assert_allclose(np.asarray(out),
                               np.asarray(ref_forward(x, params)),
                               rtol=1e-5, atol=1e-5)

    # Case 2: multi-block + partial last block (valid-length bounded loop).
    T2 = 20
    x2 = jax.random.normal(kx2, (T2, 6 * feats), jnp.float32)
    out2 = jax.block_until_ready(lstm_ad_forward(x2, params, max_tile_t=8))
    assert out2.shape == (T2, 1, feats), out2.shape
    np.testing.assert_allclose(np.asarray(out2),
                               np.asarray(ref_forward(x2, params)),
                               rtol=1e-5, atol=1e-5)

    print("KERNEL_OK")
</pallas_src>

<mosaic_0001>
module attributes {stable_mosaic.version = 11 : i64} {
  func.func @kernel(%arg0: i32, %arg1: memref<8x48xf32, #tpu.memory_space<vmem>>, %arg2: memref<48x512xf32, #tpu.memory_space<vmem>>, %arg3: memref<1x512xf32, #tpu.memory_space<vmem>>, %arg4: memref<128x512xf32, #tpu.memory_space<vmem>>, %arg5: memref<128x128xf32, #tpu.memory_space<vmem>>, %arg6: memref<1x128xf32, #tpu.memory_space<vmem>>, %arg7: memref<1x128xf32, #tpu.memory_space<vmem>>, %arg8: memref<1x128xf32, #tpu.memory_space<vmem>>, %arg9: memref<8x128xf32, #tpu.memory_space<vmem>>, %arg10: memref<8x512xf32, #tpu.memory_space<vmem>>, %arg11: memref<8x128xf32, #tpu.memory_space<vmem>>, %arg12: memref<1x128xf32, #tpu.memory_space<vmem>>, %arg13: memref<1x128xf32, #tpu.memory_space<vmem>>) attributes {dimension_semantics = [#tpu.dimension_semantics<arbitrary>], iteration_bounds = array<i64: 1>, scalar_prefetch = 0 : i64, scratch_operands = 4 : i64, tpu.core_type = #tpu.core_type<tc>, window_params = [{transform_indices = @transform_0, window_bounds = array<i64: 8, 48>}, {pipeline_mode = #tpu.pipeline_mode<synchronous>, transform_indices = @transform_1, window_bounds = array<i64: 48, 512>}, {pipeline_mode = #tpu.pipeline_mode<synchronous>, transform_indices = @transform_2, window_bounds = array<i64: 1, 512>}, {pipeline_mode = #tpu.pipeline_mode<synchronous>, transform_indices = @transform_3, window_bounds = array<i64: 128, 512>}, {pipeline_mode = #tpu.pipeline_mode<synchronous>, transform_indices = @transform_4, window_bounds = array<i64: 128, 128>}, {pipeline_mode = #tpu.pipeline_mode<synchronous>, transform_indices = @transform_5, window_bounds = array<i64: 1, 128>}, {pipeline_mode = #tpu.pipeline_mode<synchronous>, transform_indices = @transform_6, window_bounds = array<i64: 1, 128>}, {pipeline_mode = #tpu.pipeline_mode<synchronous>, transform_indices = @transform_7, window_bounds = array<i64: 1, 128>}, {transform_indices = @transform_8, window_bounds = array<i64: 8, 128>}]} {
    %c0_i32 = arith.constant 0 : i32
    %0 = arith.cmpi eq, %arg0, %c0_i32 : i32
    %1 = arith.extui %0 : i1 to i32
    %c0_i32_0 = arith.constant 0 : i32
    %2 = arith.cmpi ne, %1, %c0_i32_0 : i32
    scf.if %2 {
      %c0_77 = arith.constant 0 : index
      %c0_78 = arith.constant 0 : index
      %219 = vector.load %arg7[%c0_77, %c0_78] : memref<1x128xf32, #tpu.memory_space<vmem>>, vector<1x128xf32>
      %c0_79 = arith.constant 0 : index
      %c0_80 = arith.constant 0 : index
      %220 = vector.load %arg12[%c0_79, %c0_80] : memref<1x128xf32, #tpu.memory_space<vmem>>, vector<1x128xf32>
      tpu.vector_store %arg12[%c0_79, %c0_80], %219 {strides = array<i32>} : memref<1x128xf32, #tpu.memory_space<vmem>>, vector<1x128xf32>,
      %c0_81 = arith.constant 0 : index
      %c0_82 = arith.constant 0 : index
      %221 = vector.load %arg8[%c0_81, %c0_82] : memref<1x128xf32, #tpu.memory_space<vmem>>, vector<1x128xf32>
      %c0_83 = arith.constant 0 : index
      %c0_84 = arith.constant 0 : index
      %222 = vector.load %arg13[%c0_83, %c0_84] : memref<1x128xf32, #tpu.memory_space<vmem>>, vector<1x128xf32>
      tpu.vector_store %arg13[%c0_83, %c0_84], %221 {strides = array<i32>} : memref<1x128xf32, #tpu.memory_space<vmem>>, vector<1x128xf32>,
    } else {
    }
    %c0 = arith.constant 0 : index
    %c0_1 = arith.constant 0 : index
    %3 = vector.load %arg1[%c0, %c0_1] : memref<8x48xf32, #tpu.memory_space<vmem>>, vector<8x48xf32>
    %c0_2 = arith.constant 0 : index
    %c0_3 = arith.constant 0 : index
    %4 = vector.load %arg2[%c0_2, %c0_3] : memref<48x512xf32, #tpu.memory_space<vmem>>, vector<48x512xf32>
    %cst = arith.constant dense<0.000000e+00> : vector<8x512xf32>
    %5 = tpu.matmul %3, %4, %cst {dimension_numbers = #tpu.dot_dimension_numbers<[1], [0], [0], [1], [0, 0, 1, 1], [], []>} : vector<8x48xf32>, vector<48x512xf32>, vector<8x512xf32> -> vector<8x512xf32>
    %c0_4 = arith.constant 0 : index
    %c0_5 = arith.constant 0 : index
    %6 = vector.load %arg3[%c0_4, %c0_5] : memref<1x512xf32, #tpu.memory_space<vmem>>, vector<1x512xf32>
    %7 = vector.broadcast %6 : vector<1x512xf32> to vector<8x512xf32>
    %8 = arith.addf %5, %7 : vector<8x512xf32>
    %c0_6 = arith.constant 0 : index
    %c0_7 = arith.constant 0 : index
    %9 = vector.load %arg10[%c0_6, %c0_7] : memref<8x512xf32, #tpu.memory_space<vmem>>, vector<8x512xf32>
    tpu.vector_store %arg10[%c0_6, %c0_7], %8 {strides = array<i32>} : memref<8x512xf32, #tpu.memory_space<vmem>>, vector<8x512xf32>,
    %c0_8 = arith.constant 0 : index
    %c0_9 = arith.constant 0 : index
    %10 = vector.load %arg4[%c0_8, %c0_9] : memref<128x512xf32, #tpu.memory_space<vmem>>, vector<128x512xf32>
    %c0_10 = arith.constant 0 : index
    %c0_11 = arith.constant 0 : index
    %11 = vector.load %arg12[%c0_10, %c0_11] : memref<1x128xf32, #tpu.memory_space<vmem>>, vector<1x128xf32>
    %c0_12 = arith.constant 0 : index
    %c0_13 = arith.constant 0 : index
    %12 = vector.load %arg13[%c0_12, %c0_13] : memref<1x128xf32, #tpu.memory_space<vmem>>, vector<1x128xf32>
    %c0_i32_14 = arith.constant 0 : i32
    %13 = arith.index_cast %c0_i32_14 : i32 to index
    %c0_15 = arith.constant 0 : index
    %14 = vector.load %arg10[%13, %c0_15] : memref<8x512xf32, #tpu.memory_space<vmem>>, vector<1x512xf32>
    %cst_16 = arith.constant dense<0.000000e+00> : vector<1x512xf32>
    %15 = tpu.matmul %11, %10, %cst_16 {dimension_numbers = #tpu.dot_dimension_numbers<[1], [0], [0], [1], [0, 0, 1, 1], [], []>} : vector<1x128xf32>, vector<128x512xf32>, vector<1x512xf32> -> vector<1x512xf32>
    %16 = arith.addf %14, %15 : vector<1x512xf32>
    %17 = arith.negf %16 : vector<1x512xf32>
    %18 = math.exp %17 : vector<1x512xf32>
    %cst_17 = arith.constant 1.000000e+00 : f32
    %19 = vector.broadcast %cst_17 : f32 to vector<1x512xf32>
    %20 = arith.addf %19, %18 : vector<1x512xf32>
    %21 = arith.divf %19, %20 : vector<1x512xf32>
    %22 = vector.extract_strided_slice %21 {offsets = [0, 0], sizes = [1, 128], strides = [1, 1]} : vector<1x512xf32> to vector<1x128xf32>
    %23 = vector.extract_strided_slice %21 {offsets = [0, 128], sizes = [1, 128], strides = [1, 1]} : vector<1x512xf32> to vector<1x128xf32>
    %24 = vector.extract_strided_slice %21 {offsets = [0, 256], sizes = [1, 128], strides = [1, 1]} : vector<1x512xf32> to vector<1x128xf32>
    %cst_18 = arith.constant 2.000000e+00 : f32
    %25 = vector.broadcast %cst_18 : f32 to vector<1x128xf32>
    %26 = arith.mulf %25, %24 : vector<1x128xf32>
    %cst_19 = arith.constant 1.000000e+00 : f32
    %27 = vector.broadcast %cst_19 : f32 to vector<1x128xf32>
    %28 = arith.subf %26, %27 : vector<1x128xf32>
    %29 = vector.extract_strided_slice %21 {offsets = [0, 384], sizes = [1, 128], strides = [1, 1]} : vector<1x512xf32> to vector<1x128xf32>
    %30 = arith.mulf %23, %12 : vector<1x128xf32>
    %31 = arith.mulf %22, %28 : vector<1x128xf32>
    %32 = arith.addf %30, %31 : vector<1x128xf32>
    %33 = math.tanh %32 : vector<1x128xf32>
    %34 = arith.mulf %29, %33 : vector<1x128xf32>
    %35 = arith.index_cast %c0_i32_14 : i32 to index
    %c0_20 = arith.constant 0 : index
    %36 = vector.load %arg11[%35, %c0_20] : memref<8x128xf32, #tpu.memory_space<vmem>>, vector<1x128xf32>
    tpu.vector_store %arg11[%35, %c0_20], %34 {strides = array<i32>} : memref<8x128xf32, #tpu.memory_space<vmem>>, vector<1x128xf32>,
    %c1_i32 = arith.constant 1 : i32
    %37 = arith.index_cast %c1_i32 : i32 to index
    %c0_21 = arith.constant 0 : index
    %38 = vector.load %arg10[%37, %c0_21] : memref<8x512xf32, #tpu.memory_space<vmem>>, vector<1x512xf32>
    %cst_22 = arith.constant dense<0.000000e+00> : vector<1x512xf32>
    %39 = tpu.matmul %34, %10, %cst_22 {dimension_numbers = #tpu.dot_dimension_numbers<[1], [0], [0], [1], [0, 0, 1, 1], [], []>} : vector<1x128xf32>, vector<128x512xf32>, vector<1x512xf32> -> vector<1x512xf32>
    %40 = arith.addf %38, %39 : vector<1x512xf32>
    %41 = arith.negf %40 : vector<1x512xf32>
    %42 = math.exp %41 : vector<1x512xf32>
    %cst_23 = arith.constant 1.000000e+00 : f32
    %43 = vector.broadcast %cst_23 : f32 to vector<1x512xf32>
    %44 = arith.addf %43, %42 : vector<1x512xf32>
    %45 = arith.divf %43, %44 : vector<1x512xf32>
    %46 = vector.extract_strided_slice %45 {offsets = [0, 0], sizes = [1, 128], strides = [1, 1]} : vector<1x512xf32> to vector<1x128xf32>
    %47 = vector.extract_strided_slice %45 {offsets = [0, 128], sizes = [1, 128], strides = [1, 1]} : vector<1x512xf32> to vector<1x128xf32>
    %48 = vector.extract_strided_slice %45 {offsets = [0, 256], sizes = [1, 128], strides = [1, 1]} : vector<1x512xf32> to vector<1x128xf32>
    %cst_24 = arith.constant 2.000000e+00 : f32
    %49 = vector.broadcast %cst_24 : f32 to vector<1x128xf32>
    %50 = arith.mulf %49, %48 : vector<1x128xf32>
    %cst_25 = arith.constant 1.000000e+00 : f32
    %51 = vector.broadcast %cst_25 : f32 to vector<1x128xf32>
    %52 = arith.subf %50, %51 : vector<1x128xf32>
    %53 = vector.extract_strided_slice %45 {offsets = [0, 384], sizes = [1, 128], strides = [1, 1]} : vector<1x512xf32> to vector<1x128xf32>
    %54 = arith.mulf %47, %32 : vector<1x128xf32>
    %55 = arith.mulf %46, %52 : vector<1x128xf32>
    %56 = arith.addf %54, %55 : vector<1x128xf32>
    %57 = math.tanh %56 : vector<1x128xf32>
    %58 = arith.mulf %53, %57 : vector<1x128xf32>
    %59 = arith.index_cast %c1_i32 : i32 to index
    %c0_26 = arith.constant 0 : index
    %60 = vector.load %arg11[%59, %c0_26] : memref<8x128xf32, #tpu.memory_space<vmem>>, vector<1x128xf32>
    tpu.vector_store %arg11[%59, %c0_26], %58 {strides = array<i32>} : memref<8x128xf32, #tpu.memory_space<vmem>>, vector<1x128xf32>,
    %c2_i32 = arith.constant 2 : i32
    %61 = arith.index_cast %c2_i32 : i32 to index
    %c0_27 = arith.constant 0 : index
    %62 = vector.load %arg10[%61, %c0_27] : memref<8x512xf32, #tpu.memory_space<vmem>>, vector<1x512xf32>
    %cst_28 = arith.constant dense<0.000000e+00> : vector<1x512xf32>
    %63 = tpu.matmul %58, %10, %cst_28 {dimension_numbers = #tpu.dot_dimension_numbers<[1], [0], [0], [1], [0, 0, 1, 1], [], []>} : vector<1x128xf32>, vector<128x512xf32>, vector<1x512xf32> -> vector<1x512xf32>
    %64 = arith.addf %62, %63 : vector<1x512xf32>
    %65 = arith.negf %64 : vector<1x512xf32>
    %66 = math.exp %65 : vector<1x512xf32>
    %cst_29 = arith.constant 1.000000e+00 : f32
    %67 = vector.broadcast %cst_29 : f32 to vector<1x512xf32>
    %68 = arith.addf %67, %66 : vector<1x512xf32>
    %69 = arith.divf %67, %68 : vector<1x512xf32>
    %70 = vector.extract_strided_slice %69 {offsets = [0, 0], sizes = [1, 128], strides = [1, 1]} : vector<1x512xf32> to vector<1x128xf32>
    %71 = vector.extract_strided_slice %69 {offsets = [0, 128], sizes = [1, 128], strides = [1, 1]} : vector<1x512xf32> to vector<1x128xf32>
    %72 = vector.extract_strided_slice %69 {offsets = [0, 256], sizes = [1, 128], strides = [1, 1]} : vector<1x512xf32> to vector<1x128xf32>
    %cst_30 = arith.constant 2.000000e+00 : f32
    %73 = vector.broadcast %cst_30 : f32 to vector<1x128xf32>
    %74 = arith.mulf %73, %72 : vector<1x128xf32>
    %cst_31 = arith.constant 1.000000e+00 : f32
    %75 = vector.broadcast %cst_31 : f32 to vector<1x128xf32>
    %76 = arith.subf %74, %75 : vector<1x128xf32>
    %77 = vector.extract_strided_slice %69 {offsets = [0, 384], sizes = [1, 128], strides = [1, 1]} : vector<1x512xf32> to vector<1x128xf32>
    %78 = arith.mulf %71, %56 : vector<1x128xf32>
    %79 = arith.mulf %70, %76 : vector<1x128xf32>
    %80 = arith.addf %78, %79 : vector<1x128xf32>
    %81 = math.tanh %80 : vector<1x128xf32>
    %82 = arith.mulf %77, %81 : vector<1x128xf32>
    %83 = arith.index_cast %c2_i32 : i32 to index
    %c0_32 = arith.constant 0 : index
    %84 = vector.load %arg11[%83, %c0_32] : memref<8x128xf32, #tpu.memory_space<vmem>>, vector<1x128xf32>
    tpu.vector_store %arg11[%83, %c0_32], %82 {strides = array<i32>} : memref<8x128xf32, #tpu.memory_space<vmem>>, vector<1x128xf32>,
    %c3_i32 = arith.constant 3 : i32
    %85 = arith.index_cast %c3_i32 : i32 to index
    %c0_33 = arith.constant 0 : index
    %86 = vector.load %arg10[%85, %c0_33] : memref<8x512xf32, #tpu.memory_space<vmem>>, vector<1x512xf32>
    %cst_34 = arith.constant dense<0.000000e+00> : vector<1x512xf32>
    %87 = tpu.matmul %82, %10, %cst_34 {dimension_numbers = #tpu.dot_dimension_numbers<[1], [0], [0], [1], [0, 0, 1, 1], [], []>} : vector<1x128xf32>, vector<128x512xf32>, vector<1x512xf32> -> vector<1x512xf32>
    %88 = arith.addf %86, %87 : vector<1x512xf32>
    %89 = arith.negf %88 : vector<1x512xf32>
    %90 = math.exp %89 : vector<1x512xf32>
    %cst_35 = arith.constant 1.000000e+00 : f32
    %91 = vector.broadcast %cst_35 : f32 to vector<1x512xf32>
    %92 = arith.addf %91, %90 : vector<1x512xf32>
    %93 = arith.divf %91, %92 : vector<1x512xf32>
    %94 = vector.extract_strided_slice %93 {offsets = [0, 0], sizes = [1, 128], strides = [1, 1]} : vector<1x512xf32> to vector<1x128xf32>
    %95 = vector.extract_strided_slice %93 {offsets = [0, 128], sizes = [1, 128], strides = [1, 1]} : vector<1x512xf32> to vector<1x128xf32>
    %96 = vector.extract_strided_slice %93 {offsets = [0, 256], sizes = [1, 128], strides = [1, 1]} : vector<1x512xf32> to vector<1x128xf32>
    %cst_36 = arith.constant 2.000000e+00 : f32
    %97 = vector.broadcast %cst_36 : f32 to vector<1x128xf32>
    %98 = arith.mulf %97, %96 : vector<1x128xf32>
    %cst_37 = arith.constant 1.000000e+00 : f32
    %99 = vector.broadcast %cst_37 : f32 to vector<1x128xf32>
    %100 = arith.subf %98, %99 : vector<1x128xf32>
    %101 = vector.extract_strided_slice %93 {offsets = [0, 384], sizes = [1, 128], strides = [1, 1]} : vector<1x512xf32> to vector<1x128xf32>
    %102 = arith.mulf %95, %80 : vector<1x128xf32>
    %103 = arith.mulf %94, %100 : vector<1x128xf32>
    %104 = arith.addf %102, %103 : vector<1x128xf32>
    %105 = math.tanh %104 : vector<1x128xf32>
    %106 = arith.mulf %101, %105 : vector<1x128xf32>
    %107 = arith.index_cast %c3_i32 : i32 to index
    %c0_38 = arith.constant 0 : index
    %108 = vector.load %arg11[%107, %c0_38] : memref<8x128xf32, #tpu.memory_space<vmem>>, vector<1x128xf32>
    tpu.vector_store %arg11[%107, %c0_38], %106 {strides = array<i32>} : memref<8x128xf32, #tpu.memory_space<vmem>>, vector<1x128xf32>,
    %c4_i32 = arith.constant 4 : i32
    %109 = arith.index_cast %c4_i32 : i32 to index
    %c0_39 = arith.constant 0 : index
    %110 = vector.load %arg10[%109, %c0_39] : memref<8x512xf32, #tpu.memory_space<vmem>>, vector<1x512xf32>
    %cst_40 = arith.constant dense<0.000000e+00> : vector<1x512xf32>
    %111 = tpu.matmul %106, %10, %cst_40 {dimension_numbers = #tpu.dot_dimension_numbers<[1], [0], [0], [1], [0, 0, 1, 1], [], []>} : vector<1x128xf32>, vector<128x512xf32>, vector<1x512xf32> -> vector<1x512xf32>
    %112 = arith.addf %110, %111 : vector<1x512xf32>
    %113 = arith.negf %112 : vector<1x512xf32>
    %114 = math.exp %113 : vector<1x512xf32>
    %cst_41 = arith.constant 1.000000e+00 : f32
    %115 = vector.broadcast %cst_41 : f32 to vector<1x512xf32>
    %116 = arith.addf %115, %114 : vector<1x512xf32>
    %117 = arith.divf %115, %116 : vector<1x512xf32>
    %118 = vector.extract_strided_slice %117 {offsets = [0, 0], sizes = [1, 128], strides = [1, 1]} : vector<1x512xf32> to vector<1x128xf32>
    %119 = vector.extract_strided_slice %117 {offsets = [0, 128], sizes = [1, 128], strides = [1, 1]} : vector<1x512xf32> to vector<1x128xf32>
    %120 = vector.extract_strided_slice %117 {offsets = [0, 256], sizes = [1, 128], strides = [1, 1]} : vector<1x512xf32> to vector<1x128xf32>
    %cst_42 = arith.constant 2.000000e+00 : f32
    %121 = vector.broadcast %cst_42 : f32 to vector<1x128xf32>
    %122 = arith.mulf %121, %120 : vector<1x128xf32>
    %cst_43 = arith.constant 1.000000e+00 : f32
    %123 = vector.broadcast %cst_43 : f32 to vector<1x128xf32>
    %124 = arith.subf %122, %123 : vector<1x128xf32>
    %125 = vector.extract_strided_slice %117 {offsets = [0, 384], sizes = [1, 128], strides = [1, 1]} : vector<1x512xf32> to vector<1x128xf32>
    %126 = arith.mulf %119, %104 : vector<1x128xf32>
    %127 = arith.mulf %118, %124 : vector<1x128xf32>
    %128 = arith.addf %126, %127 : vector<1x128xf32>
    %129 = math.tanh %128 : vector<1x128xf32>
    %130 = arith.mulf %125, %129 : vector<1x128xf32>
    %131 = arith.index_cast %c4_i32 : i32 to index
    %c0_44 = arith.constant 0 : index
    %132 = vector.load %arg11[%131, %c0_44] : memref<8x128xf32, #tpu.memory_space<vmem>>, vector<1x128xf32>
    tpu.vector_store %arg11[%131, %c0_44], %130 {strides = array<i32>} : memref<8x128xf32, #tpu.memory_space<vmem>>, vector<1x128xf32>,
    %c5_i32 = arith.constant 5 : i32
    %133 = arith.index_cast %c5_i32 : i32 to index
    %c0_45 = arith.constant 0 : index
    %134 = vector.load %arg10[%133, %c0_45] : memref<8x512xf32, #tpu.memory_space<vmem>>, vector<1x512xf32>
    %cst_46 = arith.constant dense<0.000000e+00> : vector<1x512xf32>
    %135 = tpu.matmul %130, %10, %cst_46 {dimension_numbers = #tpu.dot_dimension_numbers<[1], [0], [0], [1], [0, 0, 1, 1], [], []>} : vector<1x128xf32>, vector<128x512xf32>, vector<1x512xf32> -> vector<1x512xf32>
    %136 = arith.addf %134, %135 : vector<1x512xf32>
    %137 = arith.negf %136 : vector<1x512xf32>
    %138 = math.exp %137 : vector<1x512xf32>
    %cst_47 = arith.constant 1.000000e+00 : f32
    %139 = vector.broadcast %cst_47 : f32 to vector<1x512xf32>
    %140 = arith.addf %139, %138 : vector<1x512xf32>
    %141 = arith.divf %139, %140 : vector<1x512xf32>
    %142 = vector.extract_strided_slice %141 {offsets = [0, 0], sizes = [1, 128], strides = [1, 1]} : vector<1x512xf32> to vector<1x128xf32>
    %143 = vector.extract_strided_slice %141 {offsets = [0, 128], sizes = [1, 128], strides = [1, 1]} : vector<1x512xf32> to vector<1x128xf32>
    %144 = vector.extract_strided_slice %141 {offsets = [0, 256], sizes = [1, 128], strides = [1, 1]} : vector<1x512xf32> to vector<1x128xf32>
    %cst_48 = arith.constant 2.000000e+00 : f32
    %145 = vector.broadcast %cst_48 : f32 to vector<1x128xf32>
    %146 = arith.mulf %145, %144 : vector<1x128xf32>
    %cst_49 = arith.constant 1.000000e+00 : f32
    %147 = vector.broadcast %cst_49 : f32 to vector<1x128xf32>
    %148 = arith.subf %146, %147 : vector<1x128xf32>
    %149 = vector.extract_strided_slice %141 {offsets = [0, 384], sizes = [1, 128], strides = [1, 1]} : vector<1x512xf32> to vector<1x128xf32>
    %150 = arith.mulf %143, %128 : vector<1x128xf32>
    %151 = arith.mulf %142, %148 : vector<1x128xf32>
    %152 = arith.addf %150, %151 : vector<1x128xf32>
    %153 = math.tanh %152 : vector<1x128xf32>
    %154 = arith.mulf %149, %153 : vector<1x128xf32>
    %155 = arith.index_cast %c5_i32 : i32 to index
    %c0_50 = arith.constant 0 : index
    %156 = vector.load %arg11[%155, %c0_50] : memref<8x128xf32, #tpu.memory_space<vmem>>, vector<1x128xf32>
    tpu.vector_store %arg11[%155, %c0_50], %154 {strides = array<i32>} : memref<8x128xf32, #tpu.memory_space<vmem>>, vector<1x128xf32>,
    %c6_i32 = arith.constant 6 : i32
    %157 = arith.index_cast %c6_i32 : i32 to index
    %c0_51 = arith.constant 0 : index
    %158 = vector.load %arg10[%157, %c0_51] : memref<8x512xf32, #tpu.memory_space<vmem>>, vector<1x512xf32>
    %cst_52 = arith.constant dense<0.000000e+00> : vector<1x512xf32>
    %159 = tpu.matmul %154, %10, %cst_52 {dimension_numbers = #tpu.dot_dimension_numbers<[1], [0], [0], [1], [0, 0, 1, 1], [], []>} : vector<1x128xf32>, vector<128x512xf32>, vector<1x512xf32> -> vector<1x512xf32>
    %160 = arith.addf %158, %159 : vector<1x512xf32>
    %161 = arith.negf %160 : vector<1x512xf32>
    %162 = math.exp %161 : vector<1x512xf32>
    %cst_53 = arith.constant 1.000000e+00 : f32
    %163 = vector.broadcast %cst_53 : f32 to vector<1x512xf32>
    %164 = arith.addf %163, %162 : vector<1x512xf32>
    %165 = arith.divf %163, %164 : vector<1x512xf32>
    %166 = vector.extract_strided_slice %165 {offsets = [0, 0], sizes = [1, 128], strides = [1, 1]} : vector<1x512xf32> to vector<1x128xf32>
    %167 = vector.extract_strided_slice %165 {offsets = [0, 128], sizes = [1, 128], strides = [1, 1]} : vector<1x512xf32> to vector<1x128xf32>
    %168 = vector.extract_strided_slice %165 {offsets = [0, 256], sizes = [1, 128], strides = [1, 1]} : vector<1x512xf32> to vector<1x128xf32>
    %cst_54 = arith.constant 2.000000e+00 : f32
    %169 = vector.broadcast %cst_54 : f32 to vector<1x128xf32>
    %170 = arith.mulf %169, %168 : vector<1x128xf32>
    %cst_55 = arith.constant 1.000000e+00 : f32
    %171 = vector.broadcast %cst_55 : f32 to vector<1x128xf32>
    %172 = arith.subf %170, %171 : vector<1x128xf32>
    %173 = vector.extract_strided_slice %165 {offsets = [0, 384], sizes = [1, 128], strides = [1, 1]} : vector<1x512xf32> to vector<1x128xf32>
    %174 = arith.mulf %167, %152 : vector<1x128xf32>
    %175 = arith.mulf %166, %172 : vector<1x128xf32>
    %176 = arith.addf %174, %175 : vector<1x128xf32>
    %177 = math.tanh %176 : vector<1x128xf32>
    %178 = arith.mulf %173, %177 : vector<1x128xf32>
    %179 = arith.index_cast %c6_i32 : i32 to index
    %c0_56 = arith.constant 0 : index
    %180 = vector.load %arg11[%179, %c0_56] : memref<8x128xf32, #tpu.memory_space<vmem>>, vector<1x128xf32>
    tpu.vector_store %arg11[%179, %c0_56], %178 {strides = array<i32>} : memref<8x128xf32, #tpu.memory_space<vmem>>, vector<1x128xf32>,
    %c7_i32 = arith.constant 7 : i32
    %181 = arith.index_cast %c7_i32 : i32 to index
    %c0_57 = arith.constant 0 : index
    %182 = vector.load %arg10[%181, %c0_57] : memref<8x512xf32, #tpu.memory_space<vmem>>, vector<1x512xf32>
    %cst_58 = arith.constant dense<0.000000e+00> : vector<1x512xf32>
    %183 = tpu.matmul %178, %10, %cst_58 {dimension_numbers = #tpu.dot_dimension_numbers<[1], [0], [0], [1], [0, 0, 1, 1], [], []>} : vector<1x128xf32>, vector<128x512xf32>, vector<1x512xf32> -> vector<1x512xf32>
    %184 = arith.addf %182, %183 : vector<1x512xf32>
    %185 = arith.negf %184 : vector<1x512xf32>
    %186 = math.exp %185 : vector<1x512xf32>
    %cst_59 = arith.constant 1.000000e+00 : f32
    %187 = vector.broadcast %cst_59 : f32 to vector<1x512xf32>
    %188 = arith.addf %187, %186 : vector<1x512xf32>
    %189 = arith.divf %187, %188 : vector<1x512xf32>
    %190 = vector.extract_strided_slice %189 {offsets = [0, 0], sizes = [1, 128], strides = [1, 1]} : vector<1x512xf32> to vector<1x128xf32>
    %191 = vector.extract_strided_slice %189 {offsets = [0, 128], sizes = [1, 128], strides = [1, 1]} : vector<1x512xf32> to vector<1x128xf32>
    %192 = vector.extract_strided_slice %189 {offsets = [0, 256], sizes = [1, 128], strides = [1, 1]} : vector<1x512xf32> to vector<1x128xf32>
    %cst_60 = arith.constant 2.000000e+00 : f32
    %193 = vector.broadcast %cst_60 : f32 to vector<1x128xf32>
    %194 = arith.mulf %193, %192 : vector<1x128xf32>
    %cst_61 = arith.constant 1.000000e+00 : f32
    %195 = vector.broadcast %cst_61 : f32 to vector<1x128xf32>
    %196 = arith.subf %194, %195 : vector<1x128xf32>
    %197 = vector.extract_strided_slice %189 {offsets = [0, 384], sizes = [1, 128], strides = [1, 1]} : vector<1x512xf32> to vector<1x128xf32>
    %198 = arith.mulf %191, %176 : vector<1x128xf32>
    %199 = arith.mulf %190, %196 : vector<1x128xf32>
    %200 = arith.addf %198, %199 : vector<1x128xf32>
    %201 = math.tanh %200 : vector<1x128xf32>
    %202 = arith.mulf %197, %201 : vector<1x128xf32>
    %203 = arith.index_cast %c7_i32 : i32 to index
    %c0_62 = arith.constant 0 : index
    %204 = vector.load %arg11[%203, %c0_62] : memref<8x128xf32, #tpu.memory_space<vmem>>, vector<1x128xf32>
    tpu.vector_store %arg11[%203, %c0_62], %202 {strides = array<i32>} : memref<8x128xf32, #tpu.memory_space<vmem>>, vector<1x128xf32>,
    %c8_i32 = arith.constant 8 : i32
    %c0_63 = arith.constant 0 : index
    %c0_64 = arith.constant 0 : index
    %205 = vector.load %arg12[%c0_63, %c0_64] : memref<1x128xf32, #tpu.memory_space<vmem>>, vector<1x128xf32>
    tpu.vector_store %arg12[%c0_63, %c0_64], %202 {strides = array<i32>} : memref<1x128xf32, #tpu.memory_space<vmem>>, vector<1x128xf32>,
    %c0_65 = arith.constant 0 : index
    %c0_66 = arith.constant 0 : index
    %206 = vector.load %arg13[%c0_65, %c0_66] : memref<1x128xf32, #tpu.memory_space<vmem>>, vector<1x128xf32>
    tpu.vector_store %arg13[%c0_65, %c0_66], %200 {strides = array<i32>} : memref<1x128xf32, #tpu.memory_space<vmem>>, vector<1x128xf32>,
    %c0_67 = arith.constant 0 : index
    %c0_68 = arith.constant 0 : index
    %207 = vector.load %arg11[%c0_67, %c0_68] : memref<8x128xf32, #tpu.memory_space<vmem>>, vector<8x128xf32>
    %c0_69 = arith.constant 0 : index
    %c0_70 = arith.constant 0 : index
    %208 = vector.load %arg5[%c0_69, %c0_70] : memref<128x128xf32, #tpu.memory_space<vmem>>, vector<128x128xf32>
    %cst_71 = arith.constant dense<0.000000e+00> : vector<8x128xf32>
    %209 = tpu.matmul %207, %208, %cst_71 {dimension_numbers = #tpu.dot_dimension_numbers<[1], [0], [0], [1], [0, 0, 1, 1], [], []>} : vector<8x128xf32>, vector<128x128xf32>, vector<8x128xf32> -> vector<8x128xf32>
    %c0_72 = arith.constant 0 : index
    %c0_73 = arith.constant 0 : index
    %210 = vector.load %arg6[%c0_72, %c0_73] : memref<1x128xf32, #tpu.memory_space<vmem>>, vector<1x128xf32>
    %211 = vector.broadcast %210 : vector<1x128xf32> to vector<8x128xf32>
    %212 = arith.addf %209, %211 : vector<8x128xf32>
    %213 = arith.negf %212 : vector<8x128xf32>
    %214 = math.exp %213 : vector<8x128xf32>
    %cst_74 = arith.constant 1.000000e+00 : f32
    %215 = vector.broadcast %cst_74 : f32 to vector<8x128xf32>
    %216 = arith.addf %215, %214 : vector<8x128xf32>
    %217 = arith.divf %215, %216 : vector<8x128xf32>
    %c0_75 = arith.constant 0 : index
    %c0_76 = arith.constant 0 : index
    %218 = vector.load %arg9[%c0_75, %c0_76] : memref<8x128xf32, #tpu.memory_space<vmem>>, vector<8x128xf32>
    tpu.vector_store %arg9[%c0_75, %c0_76], %217 {strides = array<i32>} : memref<8x128xf32, #tpu.memory_space<vmem>>, vector<8x128xf32>,
    return
  }
  func.func @transform_0(%arg0: i32) -> (i32, i32) {
    %c0_i32 = arith.constant 0 : i32
    %c0_i32_0 = arith.constant 0 : i32
    return %arg0, %c0_i32 : i32, i32
  }
  func.func @transform_1(%arg0: i32) -> (i32, i32) {
    %c0_i32 = arith.constant 0 : i32
    %c0_i32_0 = arith.constant 0 : i32
    %c0_i32_1 = arith.constant 0 : i32
    return %c0_i32, %c0_i32_0 : i32, i32
  }
  func.func @transform_2(%arg0: i32) -> (i32, i32) {
    %c0_i32 = arith.constant 0 : i32
    %c0_i32_0 = arith.constant 0 : i32
    %c0_i32_1 = arith.constant 0 : i32
    return %c0_i32, %c0_i32_0 : i32, i32
  }
  func.func @transform_3(%arg0: i32) -> (i32, i32) {
    %c0_i32 = arith.constant 0 : i32
    %c0_i32_0 = arith.constant 0 : i32
    %c0_i32_1 = arith.constant 0 : i32
    return %c0_i32, %c0_i32_0 : i32, i32
  }
  func.func @transform_4(%arg0: i32) -> (i32, i32) {
    %c0_i32 = arith.constant 0 : i32
    %c0_i32_0 = arith.constant 0 : i32
    %c0_i32_1 = arith.constant 0 : i32
    return %c0_i32, %c0_i32_0 : i32, i32
  }
  func.func @transform_5(%arg0: i32) -> (i32, i32) {
    %c0_i32 = arith.constant 0 : i32
    %c0_i32_0 = arith.constant 0 : i32
    %c0_i32_1 = arith.constant 0 : i32
    return %c0_i32, %c0_i32_0 : i32, i32
  }
  func.func @transform_6(%arg0: i32) -> (i32, i32) {
    %c0_i32 = arith.constant 0 : i32
    %c0_i32_0 = arith.constant 0 : i32
    %c0_i32_1 = arith.constant 0 : i32
    return %c0_i32, %c0_i32_0 : i32, i32
  }
  func.func @transform_7(%arg0: i32) -> (i32, i32) {
    %c0_i32 = arith.constant 0 : i32
    %c0_i32_0 = arith.constant 0 : i32
    %c0_i32_1 = arith.constant 0 : i32
    return %c0_i32, %c0_i32_0 : i32, i32
  }
  func.func @transform_8(%arg0: i32) -> (i32, i32) {
    %c0_i32 = arith.constant 0 : i32
    %c0_i32_0 = arith.constant 0 : i32
    return %arg0, %c0_i32 : i32, i32
  }
}

</mosaic_0001>

<llo_original>
// kernel: tpu_custom_call.1
$region0: #{tpu_custom_call.1}
  #allocation0 [shape = 'u32[]', space=smem, size = 0x4, offset = 0x4, fixed_abs, tag = 'smem constant byte address 0x4 - core index']
  #allocation1 [shape = 'u32[144,128]{1,0:T(1,128)}', space=vmem, size = 0x12000, scoped, tag = 'internal scratch']
  #allocation2 [shape = 'f32[8,512]{1,0:T(8,128)}', space=vmem, size = 0x4000, scoped, tag = 'scratch operand']
  #allocation3 [shape = 'f32[8,128]{1,0:T(8,128)}', space=vmem, size = 0x1000, scoped, tag = 'scratch operand']
  #allocation4 [shape = 'f32[1,128]{1,0:T(1,128)}', space=vmem, size = 0x200, scoped, tag = 'scratch operand']
  #allocation5 [shape = 'f32[1,128]{1,0:T(1,128)}', space=vmem, size = 0x200, scoped, tag = 'scratch operand']
  %s0 = inlined_call_operand.hbm [shape: f32[8,48], index: 0, kind: input, shape index: {}]
  %s1 = inlined_call_operand.hbm [shape: f32[48,512], index: 1, kind: input, shape index: {}]
  %s2 = inlined_call_operand.hbm [shape: f32[1,512], index: 2, kind: input, shape index: {}]
  %s3 = inlined_call_operand.hbm [shape: f32[128,512], index: 3, kind: input, shape index: {}]
  %s4 = inlined_call_operand.hbm [shape: f32[128,128], index: 4, kind: input, shape index: {}]
  %s5 = inlined_call_operand.vmem [shape: f32[1,128], index: 5, kind: input, shape index: {}]
  %s6 = inlined_call_operand.vmem [shape: f32[1,128], index: 6, kind: input, shape index: {}]
  %s7 = inlined_call_operand.vmem [shape: f32[1,128], index: 7, kind: input, shape index: {}]
  %s8 = inlined_call_operand.hbm [shape: f32[8,128], index: 8, kind: output, shape index: {}]
  %s9 = sld [smem:[#allocation0]]
  $region66: #{tpu_custom_call.1} parent=0
    _
  %s11 = ssub.s32 1, %s9
  %s12 = scalar_select 0, %s11, %s9
  $region1: #{tpu_custom_call.1} parent=0
    #allocation6 [shape = 'u8[4096]{0}', space=vmem, size = 0x1000, scoped, tag = 'input window, operand 0, single buffered']
    #allocation7 [shape = 's32[1]{0}', space=sflag, size = 0x4, scoped, tag = 'scoped memory for tpu_custom_call.1']
    #allocation8 [shape = 's32[1]{0}', space=sflag, size = 0x4, scoped, tag = 'scoped memory for tpu_custom_call.1']
    #allocation9 [shape = 'u8[98304]{0}', space=vmem, size = 0x18000, scoped, tag = 'input window, operand 1, single buffered']
    #allocation10 [shape = 's32[1]{0}', space=sflag, size = 0x4, scoped, tag = 'scoped memory for tpu_custom_call.1']
    #allocation11 [shape = 'u8[2048]{0}', space=vmem, size = 0x800, scoped, tag = 'input window, operand 2, single buffered']
    #allocation12 [shape = 'u8[262144]{0}', space=vmem, size = 0x40000, scoped, tag = 'input window, operand 3, single buffered']
    #allocation13 [shape = 's32[1]{0}', space=sflag, size = 0x4, scoped, tag = 'scoped memory for tpu_custom_call.1']
    #allocation14 [shape = 'u8[65536]{0}', space=vmem, size = 0x10000, scoped, tag = 'input window, operand 4, single buffered']
    #allocation15 [shape = 'u8[4096]{0}', space=vmem, size = 0x1000, scoped, tag = 'output window, operand 0, single buffered']
    %13 = vsyncpa [#allocation7], 0
    %14 = vsyncpa [#allocation10], 0
    %15 = vsyncpa [#allocation13], 0
    %16 = vsyncpa [#allocation8], 0
    // Predicated region
    $region2: #{tpu_custom_call.1} parent=1 // pred_check
      _
    $region3: #{tpu_custom_call.1} parent=1 // pred_check_branch
      %18 = sbr.rel (0) target = $region5
    $region4: #{tpu_custom_call.1} parent=1 // pred_region
      %s20 = ssub.s32 128, 128
      %21 = vsyncadd [#allocation7], %s20
      %s23 = sshll.u32 [#allocation6], 4
      %s24 = int_to_ptr.vmem [resolvable:$true] %s23
      %26 = dma.hbm_to_vmem [thread:$0]  %s0, 128, %s24, [#allocation7]
    $region5: #{tpu_custom_call.1} parent=1 // pred_fallthru
      _
    // Predicated region
    $region6: #{tpu_custom_call.1} parent=1 // pred_check
      _
    $region7: #{tpu_custom_call.1} parent=1 // pred_check_branch
      %28 = sbr.rel (0) target = $region9
    $region8: #{tpu_custom_call.1} parent=1 // pred_region
      %s30 = ssub.s32 3072, 3072
      %31 = vsyncadd [#allocation10], %s30
      %s32 = sshll.u32 [#allocation9], 4
      %s33 = int_to_ptr.vmem [resolvable:$true] %s32
      %38 = dma.hbm_to_vmem [thread:$0]  %s1, 3072, %s33, [#allocation10], 512, 512, 32
    $region9: #{tpu_custom_call.1} parent=1 // pred_fallthru
      _
    // Predicated region
    $region10: #{tpu_custom_call.1} parent=1 // pred_check
      _
    $region11: #{tpu_custom_call.1} parent=1 // pred_check_branch
      %40 = sbr.rel (0) target = $region13
    $region12: #{tpu_custom_call.1} parent=1 // pred_region
      %s42 = ssub.s32 64, 64
      %43 = vsyncadd [#allocation10], %s42
      %s45 = sshll.u32 [#allocation11], 4
      %s46 = int_to_ptr.vmem [resolvable:$true] %s45
      %48 = dma.hbm_to_vmem [thread:$0]  %s2, 64, %s46, [#allocation10]
    $region13: #{tpu_custom_call.1} parent=1 // pred_fallthru
      _
    // Predicated region
    $region14: #{tpu_custom_call.1} parent=1 // pred_check
      _
    $region15: #{tpu_custom_call.1} parent=1 // pred_check_branch
      %50 = sbr.rel (0) target = $region17
    $region16: #{tpu_custom_call.1} parent=1 // pred_region
      %s52 = ssub.s32 8192, 8192
      %53 = vsyncadd [#allocation13], %s52
      %s54 = sshll.u32 [#allocation12], 4
      %s55 = int_to_ptr.vmem [resolvable:$true] %s54
      %60 = dma.hbm_to_vmem [thread:$0]  %s3, 8192, %s55, [#allocation13], 512, 512, 32
    $region17: #{tpu_custom_call.1} parent=1 // pred_fallthru
      _
    // Predicated region
    $region18: #{tpu_custom_call.1} parent=1 // pred_check
      _
    $region19: #{tpu_custom_call.1} parent=1 // pred_check_branch
      %62 = sbr.rel (0) target = $region21
    $region20: #{tpu_custom_call.1} parent=1 // pred_region
      %s64 = ssub.s32 2048, 2048
      %65 = vsyncadd [#allocation13], %s64
      %s66 = sshll.u32 [#allocation14], 4
      %s67 = int_to_ptr.vmem [resolvable:$true] %s66
      %72 = dma.hbm_to_vmem [thread:$0]  %s4, 2048, %s67, [#allocation13], 128, 128, 8
    $region21: #{tpu_custom_call.1} parent=1 // pred_fallthru
      _
    // Predicated region
    $region22: #{tpu_custom_call.1} parent=1 // pred_check
      _
    $region23: #{tpu_custom_call.1} parent=1 // pred_check_branch
      %74 = sbr.rel (0) target = $region25
    $region24: #{tpu_custom_call.1} parent=1 // pred_region
      _
    $region25: #{tpu_custom_call.1} parent=1 // pred_fallthru
      _
    // Predicated region
    $region26: #{tpu_custom_call.1} parent=1 // pred_check
      _
    $region27: #{tpu_custom_call.1} parent=1 // pred_check_branch
      %76 = sbr.rel (0) target = $region29
    $region28: #{tpu_custom_call.1} parent=1 // pred_region
      _
    $region29: #{tpu_custom_call.1} parent=1 // pred_fallthru
      _
    // Predicated region
    $region30: #{tpu_custom_call.1} parent=1 // pred_check
      _
    $region31: #{tpu_custom_call.1} parent=1 // pred_check_branch
      %78 = sbr.rel (0) target = $region33
    $region32: #{tpu_custom_call.1} parent=1 // pred_region
      _
    $region33: #{tpu_custom_call.1} parent=1 // pred_fallthru
      _
    // Predicated region
    $region34: #{tpu_custom_call.1} parent=1 // pred_check
      _
    $region35: #{tpu_custom_call.1} parent=1 // pred_check_branch
      %80 = sbr.rel (0) target = $region37
    $region36: #{tpu_custom_call.1} parent=1 // pred_region
      %81 = dma.done [#allocation7], 128
    $region37: #{tpu_custom_call.1} parent=1 // pred_fallthru
      _
    // Predicated region
    $region38: #{tpu_custom_call.1} parent=1 // pred_check
      _
    $region39: #{tpu_custom_call.1} parent=1 // pred_check_branch
      %83 = sbr.rel (0) target = $region41
    $region40: #{tpu_custom_call.1} parent=1 // pred_region
      %84 = dma.done [#allocation10], 3072
    $region41: #{tpu_custom_call.1} parent=1 // pred_fallthru
      _
    // Predicated region
    $region42: #{tpu_custom_call.1} parent=1 // pred_check
      _
    $region43: #{tpu_custom_call.1} parent=1 // pred_check_branch
      %86 = sbr.rel (0) target = $region45
    $region44: #{tpu_custom_call.1} parent=1 // pred_region
      %87 = dma.done [#allocation10], 64
    $region45: #{tpu_custom_call.1} parent=1 // pred_fallthru
      _
    // Predicated region
    $region46: #{tpu_custom_call.1} parent=1 // pred_check
      _
    $region47: #{tpu_custom_call.1} parent=1 // pred_check_branch
      %89 = sbr.rel (0) target = $region49
    $region48: #{tpu_custom_call.1} parent=1 // pred_region
      %90 = dma.done [#allocation13], 8192
    $region49: #{tpu_custom_call.1} parent=1 // pred_fallthru
      _
    // Predicated region
    $region50: #{tpu_custom_call.1} parent=1 // pred_check
      _
    $region51: #{tpu_custom_call.1} parent=1 // pred_check_branch
      %92 = sbr.rel (0) target = $region53
    $region52: #{tpu_custom_call.1} parent=1 // pred_region
      %93 = dma.done [#allocation13], 2048
    $region53: #{tpu_custom_call.1} parent=1 // pred_fallthru
      _
    %p94 = scmp.eq.s32.totalorder 0, 0
    // Predicated region
    $region54: #{tpu_custom_call.1} parent=1 // pred_check
      %p95 = pneg %p94
    $region55: #{tpu_custom_call.1} parent=1 // pred_check_branch
      %97 = sbr.rel (%p95) target = $region57
    $region56: #{tpu_custom_call.1} parent=1 // pred_region
      %v98 = vld [vmem:[%s6] sm:$0x1]
      %99 = vst [vmem:[#allocation4] sm:$0x1] %v98
      %v100 = vld [vmem:[%s7] sm:$0x1]
      %101 = vst [vmem:[#allocation5] sm:$0x1] %v100
    $region57: #{tpu_custom_call.1} parent=1 // pred_fallthru
      _
    %v102 = vld [vmem:[#allocation6] sm:$0xff]
    %v103 = vld [vmem:[#allocation9] sm:$0xff]
    %v104 = vld [vmem:[#allocation9 + $0x8] sm:$0xff]
    %v105 = vld [vmem:[#allocation9 + $0x10] sm:$0xff]
    %v106 = vld [vmem:[#allocation9 + $0x18] sm:$0xff]
    %v107 = vld [vmem:[#allocation9 + $0x20] sm:$0xff]
    %v108 = vld [vmem:[#allocation9 + $0x28] sm:$0xff]
    %v109 = vld [vmem:[#allocation9 + $0x30] sm:$0xff]
    %v110 = vld [vmem:[#allocation9 + $0x38] sm:$0xff]
    %v111 = vld [vmem:[#allocation9 + $0x40] sm:$0xff]
    %v112 = vld [vmem:[#allocation9 + $0x48] sm:$0xff]
    %v113 = vld [vmem:[#allocation9 + $0x50] sm:$0xff]
    %v114 = vld [vmem:[#allocation9 + $0x58] sm:$0xff]
    %v115 = vld [vmem:[#allocation9 + $0x60] sm:$0xff]
    %v116 = vld [vmem:[#allocation9 + $0x68] sm:$0xff]
    %v117 = vld [vmem:[#allocation9 + $0x70] sm:$0xff]
    %v118 = vld [vmem:[#allocation9 + $0x78] sm:$0xff]
    %v119 = vld [vmem:[#allocation9 + $0x80] sm:$0xff]
    %v120 = vld [vmem:[#allocation9 + $0x88] sm:$0xff]
    %v121 = vld [vmem:[#allocation9 + $0x90] sm:$0xff]
    %v122 = vld [vmem:[#allocation9 + $0x98] sm:$0xff]
    %v123 = vld [vmem:[#allocation9 + $0xa0] sm:$0xff]
    %v124 = vld [vmem:[#allocation9 + $0xa8] sm:$0xff]
    %v125 = vld [vmem:[#allocation9 + $0xb0] sm:$0xff]
    %v126 = vld [vmem:[#allocation9 + $0xb8] sm:$0xff]
    %v127 = vld [vmem:[#allocation11] sm:$0xf]
    %v129 = vlaneseq
    %v130 = vshrl.u32 %v129, 7
    %v131 = vsub.s32 0, %v130
    %v132 = vrot.slane %v127, %v131
    %v133 = vlaneseq
    %v134 = vshrl.u32 %v133, 7
    %v135 = vsub.s32 1, %v134
    %v136 = vrot.slane %v127, %v135
    %v137 = vlaneseq
    %v138 = vshrl.u32 %v137, 7
    %v139 = vsub.s32 2, %v138
    %v140 = vrot.slane %v127, %v139
    %v141 = vlaneseq
    %v142 = vshrl.u32 %v141, 7
    %v143 = vsub.s32 3, %v142
    %v144 = vrot.slane %v127, %v143
    %vm149 = vcmask 392192
    %v151 = vsel %vm149, %v102, 0
    %153 = vmatprep.subr.mxu0 0.0
    %154 = vmatpush1.msra.mxu0 0.0
    %155 = vmatprep.subr.mxu0 0.0
    %156 = vmatpush1.msra.mxu0 0.0
    %157 = vmatprep.subr.mxu0 0.0
    %158 = vmatpush1.msra.mxu0 0.0
    %159 = vmatprep.subr.mxu0 0.0
    %160 = vmatpush1.msra.mxu0 0.0
    %161 = vmatprep.subr.mxu0 0.0
    %162 = vmatpush1.msra.mxu0 0.0
    %163 = vmatprep.subr.mxu0 0.0
    %164 = vmatpush1.msra.mxu0 0.0
    %165 = vmatprep.subr.mxu0 0.0
    %166 = vmatpush1.msra.mxu0 0.0
    %167 = vmatprep.subr.mxu0 0.0
    %168 = vmatpush1.msra.mxu0 0.0
    %169 = vmatprep.subr.mxu0 0.0
    %170 = vmatpush1.msra.mxu0 0.0
    %171 = vmatprep.subr.mxu0 0.0
    %172 = vmatpush1.msra.mxu0 0.0
    %173 = vmatprep.subr.mxu0 %v124
    %174 = vmatpush1.msra.mxu0 %v123
    %175 = vmatprep.subr.mxu0 %v120
    %176 = vmatpush1.msra.mxu0 %v119
    %177 = vmatprep.subr.mxu0 %v116
    %178 = vmatpush1.msra.mxu0 %v115
    %179 = vmatprep.subr.mxu0 %v112
    %180 = vmatpush1.msra.mxu0 %v111
    %181 = vmatprep.subr.mxu0 %v108
    %182 = vmatpush1.msra.mxu0 %v107
    %183 = vmatprep.subr.mxu0 %v104
    %184 = vmatpush1.msra.mxu0 %v103
    %185 = vmatprep.subr.mxu0 0.0
    %186 = vmatpush2.msra.mxu0 0.0
    %187 = vmatprep.subr.mxu0 0.0
    %188 = vmatpush2.msra.mxu0 0.0
    %189 = vmatprep.subr.mxu0 0.0
    %190 = vmatpush2.msra.mxu0 0.0
    %191 = vmatprep.subr.mxu0 0.0
    %192 = vmatpush2.msra.mxu0 0.0
    %193 = vmatprep.subr.mxu0 0.0
    %194 = vmatpush2.msra.mxu0 0.0
    %195 = vmatprep.subr.mxu0 0.0
    %196 = vmatpush2.msra.mxu0 0.0
    %197 = vmatprep.subr.mxu0 0.0
    %198 = vmatpush2.msra.mxu0 0.0
    %199 = vmatprep.subr.mxu0 0.0
    %200 = vmatpush2.msra.mxu0 0.0
    %201 = vmatprep.subr.mxu0 0.0
    %202 = vmatpush2.msra.mxu0 0.0
    %203 = vmatprep.subr.mxu0 0.0
    %204 = vmatpush2.msra.mxu0 0.0
    %205 = vmatprep.subr.mxu0 0.0
    %206 = vmatpush2.msra.mxu0 0.0
    %207 = vmatprep.subr.mxu0 0.0
    %208 = vmatpush2.msra.mxu0 0.0
    %209 = vmatprep.subr.mxu0 0.0
    %210 = vmatpush2.msra.mxu0 0.0
    %211 = vmatprep.subr.mxu0 0.0
    %212 = vmatpush2.msra.mxu0 0.0
    %213 = vmatprep.subr.mxu0 0.0
    %214 = vmatpush2.msra.mxu0 0.0
    %215 = vmatprep.subr.mxu0 0.0
    %216 = vmatpush2.msra.mxu0 0.0
    %217 = vmatprep.mubr.f32.mxu0 0.0
    %218 = vmatmul.mubr.f32.gmra.mxu0 %v151
    %v219 = vpop.f32.mrf.mxu0
    %v220 = vadd.f32 %v132, %v219
    %v221 = vpop.f32.mrf.mxu0
    %v222 = vadd.f32 %v136, %v221
    %223 = vdwg.mxu0
    %224 = vmatprep.subr.mxu0 0.0
    %225 = vmatpush1.msra.mxu0 0.0
    %226 = vmatprep.subr.mxu0 0.0
    %227 = vmatpush1.msra.mxu0 0.0
    %228 = vmatprep.subr.mxu0 0.0
    %229 = vmatpush1.msra.mxu0 0.0
    %230 = vmatprep.subr.mxu0 0.0
    %231 = vmatpush1.msra.mxu0 0.0
    %232 = vmatprep.subr.mxu0 0.0
    %233 = vmatpush1.msra.mxu0 0.0
    %234 = vmatprep.subr.mxu0 0.0
    %235 = vmatpush1.msra.mxu0 0.0
    %236 = vmatprep.subr.mxu0 0.0
    %237 = vmatpush1.msra.mxu0 0.0
    %238 = vmatprep.subr.mxu0 0.0
    %239 = vmatpush1.msra.mxu0 0.0
    %240 = vmatprep.subr.mxu0 0.0
    %241 = vmatpush1.msra.mxu0 0.0
    %242 = vmatprep.subr.mxu0 0.0
    %243 = vmatpush1.msra.mxu0 0.0
    %244 = vmatprep.subr.mxu0 %v126
    %245 = vmatpush1.msra.mxu0 %v125
    %246 = vmatprep.subr.mxu0 %v122
    %247 = vmatpush1.msra.mxu0 %v121
    %248 = vmatprep.subr.mxu0 %v118
    %249 = vmatpush1.msra.mxu0 %v117
    %250 = vmatprep.subr.mxu0 %v114
    %251 = vmatpush1.msra.mxu0 %v113
    %252 = vmatprep.subr.mxu0 %v110
    %253 = vmatpush1.msra.mxu0 %v109
    %254 = vmatprep.subr.mxu0 %v106
    %255 = vmatpush1.msra.mxu0 %v105
    %256 = vmatprep.subr.mxu0 0.0
    %257 = vmatpush2.msra.mxu0 0.0
    %258 = vmatprep.subr.mxu0 0.0
    %259 = vmatpush2.msra.mxu0 0.0
    %260 = vmatprep.subr.mxu0 0.0
    %261 = vmatpush2.msra.mxu0 0.0
    %262 = vmatprep.subr.mxu0 0.0
    %263 = vmatpush2.msra.mxu0 0.0
    %264 = vmatprep.subr.mxu0 0.0
    %265 = vmatpush2.msra.mxu0 0.0
    %266 = vmatprep.subr.mxu0 0.0
    %267 = vmatpush2.msra.mxu0 0.0
    %268 = vmatprep.subr.mxu0 0.0
    %269 = vmatpush2.msra.mxu0 0.0
    %270 = vmatprep.subr.mxu0 0.0
    %271 = vmatpush2.msra.mxu0 0.0
    %272 = vmatprep.subr.mxu0 0.0
    %273 = vmatpush2.msra.mxu0 0.0
    %274 = vmatprep.subr.mxu0 0.0
    %275 = vmatpush2.msra.mxu0 0.0
    %276 = vmatprep.subr.mxu0 0.0
    %277 = vmatpush2.msra.mxu0 0.0
    %278 = vmatprep.subr.mxu0 0.0
    %279 = vmatpush2.msra.mxu0 0.0
    %280 = vmatprep.subr.mxu0 0.0
    %281 = vmatpush2.msra.mxu0 0.0
    %282 = vmatprep.subr.mxu0 0.0
    %283 = vmatpush2.msra.mxu0 0.0
    %284 = vmatprep.subr.mxu0 0.0
    %285 = vmatpush2.msra.mxu0 0.0
    %286 = vmatprep.subr.mxu0 0.0
    %287 = vmatpush2.msra.mxu0 0.0
    %288 = vmatprep.mubr.f32.mxu0 0.0
    %289 = vmatmul.mubr.f32.gmra.mxu0 %v151
    %v290 = vpop.f32.mrf.mxu0
    %v291 = vadd.f32 %v140, %v290
    %v292 = vpop.f32.mrf.mxu0
    %v293 = vadd.f32 %v144, %v292
    %294 = vdwg.mxu0
    %295 = vst [vmem:[#allocation2] sm:$0xff] %v220
    %296 = vst [vmem:[#allocation2 + $0x8] sm:$0xff] %v222
    %297 = vst [vmem:[#allocation2 + $0x10] sm:$0xff] %v291
    %298 = vst [vmem:[#allocation2 + $0x18] sm:$0xff] %v293
    %v299 = vld [vmem:[#allocation12] sm:$0xff]
    %v300 = vld [vmem:[#allocation12 + $0x8] sm:$0xff]
    %v301 = vld [vmem:[#allocation12 + $0x10] sm:$0xff]
    %v302 = vld [vmem:[#allocation12 + $0x18] sm:$0xff]
    %v303 = vld [vmem:[#allocation12 + $0x20] sm:$0xff]
    %v304 = vld [vmem:[#allocation12 + $0x28] sm:$0xff]
    %v305 = vld [vmem:[#allocation12 + $0x30] sm:$0xff]
    %v306 = vld [vmem:[#allocation12 + $0x38] sm:$0xff]
    %v307 = vld [vmem:[#allocation12 + $0x40] sm:$0xff]
    %v308 = vld [vmem:[#allocation12 + $0x48] sm:$0xff]
    %v309 = vld [vmem:[#allocation12 + $0x50] sm:$0xff]
    %v310 = vld [vmem:[#allocation12 + $0x58] sm:$0xff]
    %v311 = vld [vmem:[#allocation12 + $0x60] sm:$0xff]
    %v312 = vld [vmem:[#allocation12 + $0x68] sm:$0xff]
    %v313 = vld [vmem:[#allocation12 + $0x70] sm:$0xff]
    %v314 = vld [vmem:[#allocation12 + $0x78] sm:$0xff]
    %v315 = vld [vmem:[#allocation12 + $0x80] sm:$0xff]
    %v316 = vld [vmem:[#allocation12 + $0x88] sm:$0xff]
    %v317 = vld [vmem:[#allocation12 + $0x90] sm:$0xff]
    %v318 = vld [vmem:[#allocation12 + $0x98] sm:$0xff]
    %v319 = vld [vmem:[#allocation12 + $0xa0] sm:$0xff]
    %v320 = vld [vmem:[#allocation12 + $0xa8] sm:$0xff]
    %v321 = vld [vmem:[#allocation12 + $0xb0] sm:$0xff]
    %v322 = vld [vmem:[#allocation12 + $0xb8] sm:$0xff]
    %v323 = vld [vmem:[#allocation12 + $0xc0] sm:$0xff]
    %v324 = vld [vmem:[#allocation12 + $0xc8] sm:$0xff]
    %v325 = vld [vmem:[#allocation12 + $0xd0] sm:$0xff]
    %v326 = vld [vmem:[#allocation12 + $0xd8] sm:$0xff]
    %v327 = vld [vmem:[#allocation12 + $0xe0] sm:$0xff]
    %v328 = vld [vmem:[#allocation12 + $0xe8] sm:$0xff]
    %v329 = vld [vmem:[#allocation12 + $0xf0] sm:$0xff]
    %v330 = vld [vmem:[#allocation12 + $0xf8] sm:$0xff]
    %v331 = vld [vmem:[#allocation12 + $0x100] sm:$0xff]
    %v332 = vld [vmem:[#allocation12 + $0x108] sm:$0xff]
    %v333 = vld [vmem:[#allocation12 + $0x110] sm:$0xff]
    %v334 = vld [vmem:[#allocation12 + $0x118] sm:$0xff]
    %v335 = vld [vmem:[#allocation12 + $0x120] sm:$0xff]
    %v336 = vld [vmem:[#allocation12 + $0x128] sm:$0xff]
    %v337 = vld [vmem:[#allocation12 + $0x130] sm:$0xff]
    %v338 = vld [vmem:[#allocation12 + $0x138] sm:$0xff]
    %v339 = vld [vmem:[#allocation12 + $0x140] sm:$0xff]
    %v340 = vld [vmem:[#allocation12 + $0x148] sm:$0xff]
    %v341 = vld [vmem:[#allocation12 + $0x150] sm:$0xff]
    %v342 = vld [vmem:[#allocation12 + $0x158] sm:$0xff]
    %v343 = vld [vmem:[#allocation12 + $0x160] sm:$0xff]
    %v344 = vld [vmem:[#allocation12 + $0x168] sm:$0xff]
    %v345 = vld [vmem:[#allocation12 + $0x170] sm:$0xff]
    %v346 = vld [vmem:[#allocation12 + $0x178] sm:$0xff]
    %v347 = vld [vmem:[#allocation12 + $0x180] sm:$0xff]
    %v348 = vld [vmem:[#allocation12 + $0x188] sm:$0xff]
    %v349 = vld [vmem:[#allocation12 + $0x190] sm:$0xff]
    %v350 = vld [vmem:[#allocation12 + $0x198] sm:$0xff]
    %v351 = vld [vmem:[#allocation12 + $0x1a0] sm:$0xff]
    %v352 = vld [vmem:[#allocation12 + $0x1a8] sm:$0xff]
    %v353 = vld [vmem:[#allocation12 + $0x1b0] sm:$0xff]
    %v354 = vld [vmem:[#allocation12 + $0x1b8] sm:$0xff]
    %v355 = vld [vmem:[#allocation12 + $0x1c0] sm:$0xff]
    %v356 = vld [vmem:[#allocation12 + $0x1c8] sm:$0xff]
    %v357 = vld [vmem:[#allocation12 + $0x1d0] sm:$0xff]
    %v358 = vld [vmem:[#allocation12 + $0x1d8] sm:$0xff]
    %v359 = vld [vmem:[#allocation12 + $0x1e0] sm:$0xff]
    %v360 = vld [vmem:[#allocation12 + $0x1e8] sm:$0xff]
    %v361 = vld [vmem:[#allocation12 + $0x1f0] sm:$0xff]
    %v362 = vld [vmem:[#allocation12 + $0x1f8] sm:$0xff]
    %v363 = vld [vmem:[#allocation4] sm:$0x1]
    %v364 = vld [vmem:[#allocation5] sm:$0x1]
    %v365 = vld [vmem:[#allocation2] ss:$8 sm:$0xf]
    %366 = vmatprep.subr.mxu0 %v360
    %367 = vmatpush1.msra.mxu0 %v359
    %368 = vmatprep.subr.mxu0 %v356
    %369 = vmatpush1.msra.mxu0 %v355
    %370 = vmatprep.subr.mxu0 %v352
    %371 = vmatpush1.msra.mxu0 %v351
    %372 = vmatprep.subr.mxu0 %v348
    %373 = vmatpush1.msra.mxu0 %v347
    %374 = vmatprep.subr.mxu0 %v344
    %375 = vmatpush1.msra.mxu0 %v343
    %376 = vmatprep.subr.mxu0 %v340
    %377 = vmatpush1.msra.mxu0 %v339
    %378 = vmatprep.subr.mxu0 %v336
    %379 = vmatpush1.msra.mxu0 %v335
    %380 = vmatprep.subr.mxu0 %v332
    %381 = vmatpush1.msra.mxu0 %v331
    %382 = vmatprep.subr.mxu0 %v328
    %383 = vmatpush1.msra.mxu0 %v327
    %384 = vmatprep.subr.mxu0 %v324
    %385 = vmatpush1.msra.mxu0 %v323
    %386 = vmatprep.subr.mxu0 %v320
    %387 = vmatpush1.msra.mxu0 %v319
    %388 = vmatprep.subr.mxu0 %v316
    %389 = vmatpush1.msra.mxu0 %v315
    %390 = vmatprep.subr.mxu0 %v312
    %391 = vmatpush1.msra.mxu0 %v311
    %392 = vmatprep.subr.mxu0 %v308
    %393 = vmatpush1.msra.mxu0 %v307
    %394 = vmatprep.subr.mxu0 %v304
    %395 = vmatpush1.msra.mxu0 %v303
    %396 = vmatprep.subr.mxu0 %v300
    %397 = vmatpush1.msra.mxu0 %v299
    %398 = vmatprep.subr.mxu0 0.0
    %399 = vmatpush2.msra.mxu0 0.0
    %400 = vmatprep.subr.mxu0 0.0
    %401 = vmatpush2.msra.mxu0 0.0
    %402 = vmatprep.subr.mxu0 0.0
    %403 = vmatpush2.msra.mxu0 0.0
    %404 = vmatprep.subr.mxu0 0.0
    %405 = vmatpush2.msra.mxu0 0.0
    %406 = vmatprep.subr.mxu0 0.0
    %407 = vmatpush2.msra.mxu0 0.0
    %408 = vmatprep.subr.mxu0 0.0
    %409 = vmatpush2.msra.mxu0 0.0
    %410 = vmatprep.subr.mxu0 0.0
    %411 = vmatpush2.msra.mxu0 0.0
    %412 = vmatprep.subr.mxu0 0.0
    %413 = vmatpush2.msra.mxu0 0.0
    %414 = vmatprep.subr.mxu0 0.0
    %415 = vmatpush2.msra.mxu0 0.0
    %416 = vmatprep.subr.mxu0 0.0
    %417 = vmatpush2.msra.mxu0 0.0
    %418 = vmatprep.subr.mxu0 0.0
    %419 = vmatpush2.msra.mxu0 0.0
    %420 = vmatprep.subr.mxu0 0.0
    %421 = vmatpush2.msra.mxu0 0.0
    %422 = vmatprep.subr.mxu0 0.0
    %423 = vmatpush2.msra.mxu0 0.0
    %424 = vmatprep.subr.mxu0 0.0
    %425 = vmatpush2.msra.mxu0 0.0
    %426 = vmatprep.subr.mxu0 0.0
    %427 = vmatpush2.msra.mxu0 0.0
    %428 = vmatprep.subr.mxu0 0.0
    %429 = vmatpush2.msra.mxu0 0.0
    %430 = vmatprep.mubr.f32.mxu0 0.0
    %431 = vmatmul.mubr.f32.gmra.mxu0 %v363
    %v432 = vpop.f32.mrf.mxu0
    %v433 = vadd.f32 0.0, %v432
    %v434 = vpop.f32.mrf.mxu0
    %v435 = vadd.f32 0.0, %v434
    %436 = vdwg.mxu0
    %437 = vmatprep.subr.mxu0 %v362
    %438 = vmatpush1.msra.mxu0 %v361
    %439 = vmatprep.subr.mxu0 %v358
    %440 = vmatpush1.msra.mxu0 %v357
    %441 = vmatprep.subr.mxu0 %v354
    %442 = vmatpush1.msra.mxu0 %v353
    %443 = vmatprep.subr.mxu0 %v350
    %444 = vmatpush1.msra.mxu0 %v349
    %445 = vmatprep.subr.mxu0 %v346
    %446 = vmatpush1.msra.mxu0 %v345
    %447 = vmatprep.subr.mxu0 %v342
    %448 = vmatpush1.msra.mxu0 %v341
    %449 = vmatprep.subr.mxu0 %v338
    %450 = vmatpush1.msra.mxu0 %v337
    %451 = vmatprep.subr.mxu0 %v334
    %452 = vmatpush1.msra.mxu0 %v333
    %453 = vmatprep.subr.mxu0 %v330
    %454 = vmatpush1.msra.mxu0 %v329
    %455 = vmatprep.subr.mxu0 %v326
    %456 = vmatpush1.msra.mxu0 %v325
    %457 = vmatprep.subr.mxu0 %v322
    %458 = vmatpush1.msra.mxu0 %v321
    %459 = vmatprep.subr.mxu0 %v318
    %460 = vmatpush1.msra.mxu0 %v317
    %461 = vmatprep.subr.mxu0 %v314
    %462 = vmatpush1.msra.mxu0 %v313
    %463 = vmatprep.subr.mxu0 %v310
    %464 = vmatpush1.msra.mxu0 %v309
    %465 = vmatprep.subr.mxu0 %v306
    %466 = vmatpush1.msra.mxu0 %v305
    %467 = vmatprep.subr.mxu0 %v302
    %468 = vmatpush1.msra.mxu0 %v301
    %469 = vmatprep.subr.mxu0 0.0
    %470 = vmatpush2.msra.mxu0 0.0
    %471 = vmatprep.subr.mxu0 0.0
    %472 = vmatpush2.msra.mxu0 0.0
    %473 = vmatprep.subr.mxu0 0.0
    %474 = vmatpush2.msra.mxu0 0.0
    %475 = vmatprep.subr.mxu0 0.0
    %476 = vmatpush2.msra.mxu0 0.0
    %477 = vmatprep.subr.mxu0 0.0
    %478 = vmatpush2.msra.mxu0 0.0
    %479 = vmatprep.subr.mxu0 0.0
    %480 = vmatpush2.msra.mxu0 0.0
    %481 = vmatprep.subr.mxu0 0.0
    %482 = vmatpush2.msra.mxu0 0.0
    %483 = vmatprep.subr.mxu0 0.0
    %484 = vmatpush2.msra.mxu0 0.0
    %485 = vmatprep.subr.mxu0 0.0
    %486 = vmatpush2.msra.mxu0 0.0
    %487 = vmatprep.subr.mxu0 0.0
    %488 = vmatpush2.msra.mxu0 0.0
    %489 = vmatprep.subr.mxu0 0.0
    %490 = vmatpush2.msra.mxu0 0.0
    %491 = vmatprep.subr.mxu0 0.0
    %492 = vmatpush2.msra.mxu0 0.0
    %493 = vmatprep.subr.mxu0 0.0
    %494 = vmatpush2.msra.mxu0 0.0
    %495 = vmatprep.subr.mxu0 0.0
    %496 = vmatpush2.msra.mxu0 0.0
    %497 = vmatprep.subr.mxu0 0.0
    %498 = vmatpush2.msra.mxu0 0.0
    %499 = vmatprep.subr.mxu0 0.0
    %500 = vmatpush2.msra.mxu0 0.0
    %501 = vmatprep.mubr.f32.mxu0 0.0
    %502 = vmatmul.mubr.f32.gmra.mxu0 %v363
    %v503 = vpop.f32.mrf.mxu0
    %v504 = vadd.f32 0.0, %v503
    %v505 = vpop.f32.mrf.mxu0
    %v506 = vadd.f32 0.0, %v505
    %507 = vdwg.mxu0
    %v512 = vcombine.low %v433, %v435
    %v513 = vcombine.low %v504, %v506
    %v515 = vunpack.c.l.s4 1966171168
    %v516 = vunpack.c.0.s8 %v515
    %v517 = vlaneseq
    %v518 = vshrl.u32 %v517, 7
    %v519 = vsub.s32 %v516, %v518
    %v520 = vrot.slane %v512, %v519
    %v522 = vunpack.c.l.s4 1966171168
    %v523 = vunpack.c.0.s8 %v522
    %v524 = vlaneseq
    %v525 = vshrl.u32 %v524, 7
    %v526 = vsub.s32 %v523, %v525
    %v527 = vrot.slane %v513, %v526
    %v528 = vcombine.low %v520, %v527
    %v530 = vunpack.c.l.s4 1966171168
    %v531 = vunpack.c.0.s8 %v530
    %v532 = vlaneseq
    %v533 = vshrl.u32 %v532, 7
    %v534 = vsub.s32 %v531, %v533
    %v535 = vrot.slane %v528, %v534
    %v537 = vadd.f32 %v365, %v535
    %v538 = vxor.u32 %v537, 2147483648
    %v539 = vmul.f32 %v538, 1.442695
    %v540 = vpow.pop %v539
    %v541 = vadd.f32 %v540, 1.0
    %v542 = vrcp.pop %v541
    %v543 = vmul.f32 1.0, %v542
    %v545 = vrot.slane %v543, 2
    %v547 = vmul.f32 %v545, 2.0
    %v548 = vsub.f32 %v547, 1.0
    %v549 = vrot.slane %v543, 1
    %v551 = vmul.f32 %v549, %v364
    %v552 = vmul.f32 %v543, %v548
    %v553 = vadd.f32 %v551, %v552
    %v554 = vtanh.pop %v553
    %v555 = vrot.slane %v543, 3
    %v557 = vmul.f32 %v555, %v554
    %558 = vst [vmem:[#allocation3] sm:$0x1] %v557
    %s559 = scalar_lea.vmem [#allocation2], 1
    %v560 = vld [vmem:[%s559] ss:$8 sm:$0xf]
    %561 = vmatprep.subr.mxu0 %v360
    %562 = vmatpush1.msra.mxu0 %v359
    %563 = vmatprep.subr.mxu0 %v356
    %564 = vmatpush1.msra.mxu0 %v355
    %565 = vmatprep.subr.mxu0 %v352
    %566 = vmatpush1.msra.mxu0 %v351
    %567 = vmatprep.subr.mxu0 %v348
    %568 = vmatpush1.msra.mxu0 %v347
    %569 = vmatprep.subr.mxu0 %v344
    %570 = vmatpush1.msra.mxu0 %v343
    %571 = vmatprep.subr.mxu0 %v340
    %572 = vmatpush1.msra.mxu0 %v339
    %573 = vmatprep.subr.mxu0 %v336
    %574 = vmatpush1.msra.mxu0 %v335
    %575 = vmatprep.subr.mxu0 %v332
    %576 = vmatpush1.msra.mxu0 %v331
    %577 = vmatprep.subr.mxu0 %v328
    %578 = vmatpush1.msra.mxu0 %v327
    %579 = vmatprep.subr.mxu0 %v324
    %580 = vmatpush1.msra.mxu0 %v323
    %581 = vmatprep.subr.mxu0 %v320
    %582 = vmatpush1.msra.mxu0 %v319
    %583 = vmatprep.subr.mxu0 %v316
    %584 = vmatpush1.msra.mxu0 %v315
    %585 = vmatprep.subr.mxu0 %v312
    %586 = vmatpush1.msra.mxu0 %v311
    %587 = vmatprep.subr.mxu0 %v308
    %588 = vmatpush1.msra.mxu0 %v307
    %589 = vmatprep.subr.mxu0 %v304
    %590 = vmatpush1.msra.mxu0 %v303
    %591 = vmatprep.subr.mxu0 %v300
    %592 = vmatpush1.msra.mxu0 %v299
    %593 = vmatprep.subr.mxu0 0.0
    %594 = vmatpush2.msra.mxu0 0.0
    %595 = vmatprep.subr.mxu0 0.0
    %596 = vmatpush2.msra.mxu0 0.0
    %597 = vmatprep.subr.mxu0 0.0
    %598 = vmatpush2.msra.mxu0 0.0
    %599 = vmatprep.subr.mxu0 0.0
    %600 = vmatpush2.msra.mxu0 0.0
    %601 = vmatprep.subr.mxu0 0.0
    %602 = vmatpush2.msra.mxu0 0.0
    %603 = vmatprep.subr.mxu0 0.0
    %604 = vmatpush2.msra.mxu0 0.0
    %605 = vmatprep.subr.mxu0 0.0
    %606 = vmatpush2.msra.mxu0 0.0
    %607 = vmatprep.subr.mxu0 0.0
    %608 = vmatpush2.msra.mxu0 0.0
    %609 = vmatprep.subr.mxu0 0.0
    %610 = vmatpush2.msra.mxu0 0.0
    %611 = vmatprep.subr.mxu0 0.0
    %612 = vmatpush2.msra.mxu0 0.0
    %613 = vmatprep.subr.mxu0 0.0
    %614 = vmatpush2.msra.mxu0 0.0
    %615 = vmatprep.subr.mxu0 0.0
    %616 = vmatpush2.msra.mxu0 0.0
    %617 = vmatprep.subr.mxu0 0.0
    %618 = vmatpush2.msra.mxu0 0.0
    %619 = vmatprep.subr.mxu0 0.0
    %620 = vmatpush2.msra.mxu0 0.0
    %621 = vmatprep.subr.mxu0 0.0
    %622 = vmatpush2.msra.mxu0 0.0
    %623 = vmatprep.subr.mxu0 0.0
    %624 = vmatpush2.msra.mxu0 0.0
    %625 = vmatprep.mubr.f32.mxu0 0.0
    %626 = vmatmul.mubr.f32.gmra.mxu0 %v557
    %v627 = vpop.f32.mrf.mxu0
    %v628 = vadd.f32 0.0, %v627
    %v629 = vpop.f32.mrf.mxu0
    %v630 = vadd.f32 0.0, %v629
    %631 = vdwg.mxu0
    %632 = vmatprep.subr.mxu0 %v362
    %633 = vmatpush1.msra.mxu0 %v361
    %634 = vmatprep.subr.mxu0 %v358
    %635 = vmatpush1.msra.mxu0 %v357
    %636 = vmatprep.subr.mxu0 %v354
    %637 = vmatpush1.msra.mxu0 %v353
    %638 = vmatprep.subr.mxu0 %v350
    %639 = vmatpush1.msra.mxu0 %v349
    %640 = vmatprep.subr.mxu0 %v346
    %641 = vmatpush1.msra.mxu0 %v345
    %642 = vmatprep.subr.mxu0 %v342
    %643 = vmatpush1.msra.mxu0 %v341
    %644 = vmatprep.subr.mxu0 %v338
    %645 = vmatpush1.msra.mxu0 %v337
    %646 = vmatprep.subr.mxu0 %v334
    %647 = vmatpush1.msra.mxu0 %v333
    %648 = vmatprep.subr.mxu0 %v330
    %649 = vmatpush1.msra.mxu0 %v329
    %650 = vmatprep.subr.mxu0 %v326
    %651 = vmatpush1.msra.mxu0 %v325
    %652 = vmatprep.subr.mxu0 %v322
    %653 = vmatpush1.msra.mxu0 %v321
    %654 = vmatprep.subr.mxu0 %v318
    %655 = vmatpush1.msra.mxu0 %v317
    %656 = vmatprep.subr.mxu0 %v314
    %657 = vmatpush1.msra.mxu0 %v313
    %658 = vmatprep.subr.mxu0 %v310
    %659 = vmatpush1.msra.mxu0 %v309
    %660 = vmatprep.subr.mxu0 %v306
    %661 = vmatpush1.msra.mxu0 %v305
    %662 = vmatprep.subr.mxu0 %v302
    %663 = vmatpush1.msra.mxu0 %v301
    %664 = vmatprep.subr.mxu0 0.0
    %665 = vmatpush2.msra.mxu0 0.0
    %666 = vmatprep.subr.mxu0 0.0
    %667 = vmatpush2.msra.mxu0 0.0
    %668 = vmatprep.subr.mxu0 0.0
    %669 = vmatpush2.msra.mxu0 0.0
    %670 = vmatprep.subr.mxu0 0.0
    %671 = vmatpush2.msra.mxu0 0.0
    %672 = vmatprep.subr.mxu0 0.0
    %673 = vmatpush2.msra.mxu0 0.0
    %674 = vmatprep.subr.mxu0 0.0
    %675 = vmatpush2.msra.mxu0 0.0
    %676 = vmatprep.subr.mxu0 0.0
    %677 = vmatpush2.msra.mxu0 0.0
    %678 = vmatprep.subr.mxu0 0.0
    %679 = vmatpush2.msra.mxu0 0.0
    %680 = vmatprep.subr.mxu0 0.0
    %681 = vmatpush2.msra.mxu0 0.0
    %682 = vmatprep.subr.mxu0 0.0
    %683 = vmatpush2.msra.mxu0 0.0
    %684 = vmatprep.subr.mxu0 0.0
    %685 = vmatpush2.msra.mxu0 0.0
    %686 = vmatprep.subr.mxu0 0.0
    %687 = vmatpush2.msra.mxu0 0.0
    %688 = vmatprep.subr.mxu0 0.0
    %689 = vmatpush2.msra.mxu0 0.0
    %690 = vmatprep.subr.mxu0 0.0
    %691 = vmatpush2.msra.mxu0 0.0
    %692 = vmatprep.subr.mxu0 0.0
    %693 = vmatpush2.msra.mxu0 0.0
    %694 = vmatprep.subr.mxu0 0.0
    %695 = vmatpush2.msra.mxu0 0.0
    %696 = vmatprep.mubr.f32.mxu0 0.0
    %697 = vmatmul.mubr.f32.gmra.mxu0 %v557
    %v698 = vpop.f32.mrf.mxu0
    %v699 = vadd.f32 0.0, %v698
    %v700 = vpop.f32.mrf.mxu0
    %v701 = vadd.f32 0.0, %v700
    %702 = vdwg.mxu0
    %v707 = vcombine.low %v628, %v630
    %v708 = vcombine.low %v699, %v701
    %v710 = vunpack.c.l.s4 1966171168
    %v711 = vunpack.c.0.s8 %v710
    %v712 = vlaneseq
    %v713 = vshrl.u32 %v712, 7
    %v714 = vsub.s32 %v711, %v713
    %v715 = vrot.slane %v707, %v714
    %v717 = vunpack.c.l.s4 1966171168
    %v718 = vunpack.c.0.s8 %v717
    %v719 = vlaneseq
    %v720 = vshrl.u32 %v719, 7
    %v721 = vsub.s32 %v718, %v720
    %v722 = vrot.slane %v708, %v721
    %v723 = vcombine.low %v715, %v722
    %v725 = vunpack.c.l.s4 1966171168
    %v726 = vunpack.c.0.s8 %v725
    %v727 = vlaneseq
    %v728 = vshrl.u32 %v727, 7
    %v729 = vsub.s32 %v726, %v728
    %v730 = vrot.slane %v723, %v729
    %v732 = vadd.f32 %v560, %v730
    %v733 = vxor.u32 %v732, 2147483648
    %v734 = vmul.f32 %v733, 1.442695
    %v735 = vpow.pop %v734
    %v736 = vadd.f32 %v735, 1.0
    %v737 = vrcp.pop %v736
    %v738 = vmul.f32 1.0, %v737
    %v740 = vrot.slane %v738, 2
    %v742 = vmul.f32 %v740, 2.0
    %v743 = vsub.f32 %v742, 1.0
    %v744 = vrot.slane %v738, 1
    %v746 = vmul.f32 %v744, %v553
    %v747 = vmul.f32 %v738, %v743
    %v748 = vadd.f32 %v746, %v747
    %v749 = vtanh.pop %v748
    %v750 = vrot.slane %v738, 3
    %v752 = vmul.f32 %v750, %v749
    %753 = vst [vmem:[#allocation3 + $0x1] sm:$0x1] %v752
    %s754 = scalar_lea.vmem [#allocation2], 2
    %v755 = vld [vmem:[%s754] ss:$8 sm:$0xf]
    %756 = vmatprep.subr.mxu0 %v360
    %757 = vmatpush1.msra.mxu0 %v359
    %758 = vmatprep.subr.mxu0 %v356
    %759 = vmatpush1.msra.mxu0 %v355
    %760 = vmatprep.subr.mxu0 %v352
    %761 = vmatpush1.msra.mxu0 %v351
    %762 = vmatprep.subr.mxu0 %v348
    %763 = vmatpush1.msra.mxu0 %v347
    %764 = vmatprep.subr.mxu0 %v344
    %765 = vmatpush1.msra.mxu0 %v343
    %766 = vmatprep.subr.mxu0 %v340
    %767 = vmatpush1.msra.mxu0 %v339
    %768 = vmatprep.subr.mxu0 %v336
    %769 = vmatpush1.msra.mxu0 %v335
    %770 = vmatprep.subr.mxu0 %v332
    %771 = vmatpush1.msra.mxu0 %v331
    %772 = vmatprep.subr.mxu0 %v328
    %773 = vmatpush1.msra.mxu0 %v327
    %774 = vmatprep.subr.mxu0 %v324
    %775 = vmatpush1.msra.mxu0 %v323
    %776 = vmatprep.subr.mxu0 %v320
    %777 = vmatpush1.msra.mxu0 %v319
    %778 = vmatprep.subr.mxu0 %v316
    %779 = vmatpush1.msra.mxu0 %v315
    %780 = vmatprep.subr.mxu0 %v312
    %781 = vmatpush1.msra.mxu0 %v311
    %782 = vmatprep.subr.mxu0 %v308
    %783 = vmatpush1.msra.mxu0 %v307
    %784 = vmatprep.subr.mxu0 %v304
    %785 = vmatpush1.msra.mxu0 %v303
    %786 = vmatprep.subr.mxu0 %v300
    %787 = vmatpush1.msra.mxu0 %v299
    %788 = vmatprep.subr.mxu0 0.0
    %789 = vmatpush2.msra.mxu0 0.0
    %790 = vmatprep.subr.mxu0 0.0
    %791 = vmatpush2.msra.mxu0 0.0
    %792 = vmatprep.subr.mxu0 0.0
    %793 = vmatpush2.msra.mxu0 0.0
    %794 = vmatprep.subr.mxu0 0.0
    %795 = vmatpush2.msra.mxu0 0.0
    %796 = vmatprep.subr.mxu0 0.0
    %797 = vmatpush2.msra.mxu0 0.0
    %798 = vmatprep.subr.mxu0 0.0
    %799 = vmatpush2.msra.mxu0 0.0
    %800 = vmatprep.subr.mxu0 0.0
    %801 = vmatpush2.msra.mxu0 0.0
    %802 = vmatprep.subr.mxu0 0.0
    %803 = vmatpush2.msra.mxu0 0.0
    %804 = vmatprep.subr.mxu0 0.0
    %805 = vmatpush2.msra.mxu0 0.0
    %806 = vmatprep.subr.mxu0 0.0
    %807 = vmatpush2.msra.mxu0 0.0
    %808 = vmatprep.subr.mxu0 0.0
    %809 = vmatpush2.msra.mxu0 0.0
    %810 = vmatprep.subr.mxu0 0.0
    %811 = vmatpush2.msra.mxu0 0.0
    %812 = vmatprep.subr.mxu0 0.0
    %813 = vmatpush2.msra.mxu0 0.0
    %814 = vmatprep.subr.mxu0 0.0
    %815 = vmatpush2.msra.mxu0 0.0
    %816 = vmatprep.subr.mxu0 0.0
    %817 = vmatpush2.msra.mxu0 0.0
    %818 = vmatprep.subr.mxu0 0.0
    %819 = vmatpush2.msra.mxu0 0.0
    %820 = vmatprep.mubr.f32.mxu0 0.0
    %821 = vmatmul.mubr.f32.gmra.mxu0 %v752
    %v822 = vpop.f32.mrf.mxu0
    %v823 = vadd.f32 0.0, %v822
    %v824 = vpop.f32.mrf.mxu0
    %v825 = vadd.f32 0.0, %v824
    %826 = vdwg.mxu0
    %827 = vmatprep.subr.mxu0 %v362
    %828 = vmatpush1.msra.mxu0 %v361
    %829 = vmatprep.subr.mxu0 %v358
    %830 = vmatpush1.msra.mxu0 %v357
    %831 = vmatprep.subr.mxu0 %v354
    %832 = vmatpush1.msra.mxu0 %v353
    %833 = vmatprep.subr.mxu0 %v350
    %834 = vmatpush1.msra.mxu0 %v349
    %835 = vmatprep.subr.mxu0 %v346
    %836 = vmatpush1.msra.mxu0 %v345
    %837 = vmatprep.subr.mxu0 %v342
    %838 = vmatpush1.msra.mxu0 %v341
    %839 = vmatprep.subr.mxu0 %v338
    %840 = vmatpush1.msra.mxu0 %v337
    %841 = vmatprep.subr.mxu0 %v334
    %842 = vmatpush1.msra.mxu0 %v333
    %843 = vmatprep.subr.mxu0 %v330
    %844 = vmatpush1.msra.mxu0 %v329
    %845 = vmatprep.subr.mxu0 %v326
    %846 = vmatpush1.msra.mxu0 %v325
    %847 = vmatprep.subr.mxu0 %v322
    %848 = vmatpush1.msra.mxu0 %v321
    %849 = vmatprep.subr.mxu0 %v318
    %850 = vmatpush1.msra.mxu0 %v317
    %851 = vmatprep.subr.mxu0 %v314
    %852 = vmatpush1.msra.mxu0 %v313
    %853 = vmatprep.subr.mxu0 %v310
    %854 = vmatpush1.msra.mxu0 %v309
    %855 = vmatprep.subr.mxu0 %v306
    %856 = vmatpush1.msra.mxu0 %v305
    %857 = vmatprep.subr.mxu0 %v302
    %858 = vmatpush1.msra.mxu0 %v301
    %859 = vmatprep.subr.mxu0 0.0
    %860 = vmatpush2.msra.mxu0 0.0
    %861 = vmatprep.subr.mxu0 0.0
    %862 = vmatpush2.msra.mxu0 0.0
    %863 = vmatprep.subr.mxu0 0.0
    %864 = vmatpush2.msra.mxu0 0.0
    %865 = vmatprep.subr.mxu0 0.0
    %866 = vmatpush2.msra.mxu0 0.0
    %867 = vmatprep.subr.mxu0 0.0
    %868 = vmatpush2.msra.mxu0 0.0
    %869 = vmatprep.subr.mxu0 0.0
    %870 = vmatpush2.msra.mxu0 0.0
    %871 = vmatprep.subr.mxu0 0.0
    %872 = vmatpush2.msra.mxu0 0.0
    %873 = vmatprep.subr.mxu0 0.0
    %874 = vmatpush2.msra.mxu0 0.0
    %875 = vmatprep.subr.mxu0 0.0
    %876 = vmatpush2.msra.mxu0 0.0
    %877 = vmatprep.subr.mxu0 0.0
    %878 = vmatpush2.msra.mxu0 0.0
    %879 = vmatprep.subr.mxu0 0.0
    %880 = vmatpush2.msra.mxu0 0.0
    %881 = vmatprep.subr.mxu0 0.0
    %882 = vmatpush2.msra.mxu0 0.0
    %883 = vmatprep.subr.mxu0 0.0
    %884 = vmatpush2.msra.mxu0 0.0
    %885 = vmatprep.subr.mxu0 0.0
    %886 = vmatpush2.msra.mxu0 0.0
    %887 = vmatprep.subr.mxu0 0.0
    %888 = vmatpush2.msra.mxu0 0.0
    %889 = vmatprep.subr.mxu0 0.0
    %890 = vmatpush2.msra.mxu0 0.0
    %891 = vmatprep.mubr.f32.mxu0 0.0
    %892 = vmatmul.mubr.f32.gmra.mxu0 %v752
    %v893 = vpop.f32.mrf.mxu0
    %v894 = vadd.f32 0.0, %v893
    %v895 = vpop.f32.mrf.mxu0
    %v896 = vadd.f32 0.0, %v895
    %897 = vdwg.mxu0
    %v902 = vcombine.low %v823, %v825
    %v903 = vcombine.low %v894, %v896
    %v905 = vunpack.c.l.s4 1966171168
    %v906 = vunpack.c.0.s8 %v905
    %v907 = vlaneseq
    %v908 = vshrl.u32 %v907, 7
    %v909 = vsub.s32 %v906, %v908
    %v910 = vrot.slane %v902, %v909
    %v912 = vunpack.c.l.s4 1966171168
    %v913 = vunpack.c.0.s8 %v912
    %v914 = vlaneseq
    %v915 = vshrl.u32 %v914, 7
    %v916 = vsub.s32 %v913, %v915
    %v917 = vrot.slane %v903, %v916
    %v918 = vcombine.low %v910, %v917
    %v920 = vunpack.c.l.s4 1966171168
    %v921 = vunpack.c.0.s8 %v920
    %v922 = vlaneseq
    %v923 = vshrl.u32 %v922, 7
    %v924 = vsub.s32 %v921, %v923
    %v925 = vrot.slane %v918, %v924
    %v927 = vadd.f32 %v755, %v925
    %v928 = vxor.u32 %v927, 2147483648
    %v929 = vmul.f32 %v928, 1.442695
    %v930 = vpow.pop %v929
    %v931 = vadd.f32 %v930, 1.0
    %v932 = vrcp.pop %v931
    %v933 = vmul.f32 1.0, %v932
    %v935 = vrot.slane %v933, 2
    %v937 = vmul.f32 %v935, 2.0
    %v938 = vsub.f32 %v937, 1.0
    %v939 = vrot.slane %v933, 1
    %v941 = vmul.f32 %v939, %v748
    %v942 = vmul.f32 %v933, %v938
    %v943 = vadd.f32 %v941, %v942
    %v944 = vtanh.pop %v943
    %v945 = vrot.slane %v933, 3
    %v947 = vmul.f32 %v945, %v944
    %948 = vst [vmem:[#allocation3 + $0x2] sm:$0x1] %v947
    %s949 = scalar_lea.vmem [#allocation2], 3
    %v950 = vld [vmem:[%s949] ss:$8 sm:$0xf]
    %951 = vmatprep.subr.mxu0 %v360
    %952 = vmatpush1.msra.mxu0 %v359
    %953 = vmatprep.subr.mxu0 %v356
    %954 = vmatpush1.msra.mxu0 %v355
    %955 = vmatprep.subr.mxu0 %v352
    %956 = vmatpush1.msra.mxu0 %v351
    %957 = vmatprep.subr.mxu0 %v348
    %958 = vmatpush1.msra.mxu0 %v347
    %959 = vmatprep.subr.mxu0 %v344
    %960 = vmatpush1.msra.mxu0 %v343
    %961 = vmatprep.subr.mxu0 %v340
    %962 = vmatpush1.msra.mxu0 %v339
    %963 = vmatprep.subr.mxu0 %v336
    %964 = vmatpush1.msra.mxu0 %v335
    %965 = vmatprep.subr.mxu0 %v332
    %966 = vmatpush1.msra.mxu0 %v331
    %967 = vmatprep.subr.mxu0 %v328
    %968 = vmatpush1.msra.mxu0 %v327
    %969 = vmatprep.subr.mxu0 %v324
    %970 = vmatpush1.msra.mxu0 %v323
    %971 = vmatprep.subr.mxu0 %v320
    %972 = vmatpush1.msra.mxu0 %v319
    %973 = vmatprep.subr.mxu0 %v316
    %974 = vmatpush1.msra.mxu0 %v315
    %975 = vmatprep.subr.mxu0 %v312
    %976 = vmatpush1.msra.mxu0 %v311
    %977 = vmatprep.subr.mxu0 %v308
    %978 = vmatpush1.msra.mxu0 %v307
    %979 = vmatprep.subr.mxu0 %v304
    %980 = vmatpush1.msra.mxu0 %v303
    %981 = vmatprep.subr.mxu0 %v300
    %982 = vmatpush1.msra.mxu0 %v299
    %983 = vmatprep.subr.mxu0 0.0
    %984 = vmatpush2.msra.mxu0 0.0
    %985 = vmatprep.subr.mxu0 0.0
    %986 = vmatpush2.msra.mxu0 0.0
    %987 = vmatprep.subr.mxu0 0.0
    %988 = vmatpush2.msra.mxu0 0.0
    %989 = vmatprep.subr.mxu0 0.0
    %990 = vmatpush2.msra.mxu0 0.0
    %991 = vmatprep.subr.mxu0 0.0
    %992 = vmatpush2.msra.mxu0 0.0
    %993 = vmatprep.subr.mxu0 0.0
    %994 = vmatpush2.msra.mxu0 0.0
    %995 = vmatprep.subr.mxu0 0.0
    %996 = vmatpush2.msra.mxu0 0.0
    %997 = vmatprep.subr.mxu0 0.0
    %998 = vmatpush2.msra.mxu0 0.0
    %999 = vmatprep.subr.mxu0 0.0
    %1000 = vmatpush2.msra.mxu0 0.0
    %1001 = vmatprep.subr.mxu0 0.0
    %1002 = vmatpush2.msra.mxu0 0.0
    %1003 = vmatprep.subr.mxu0 0.0
    %1004 = vmatpush2.msra.mxu0 0.0
    %1005 = vmatprep.subr.mxu0 0.0
    %1006 = vmatpush2.msra.mxu0 0.0
    %1007 = vmatprep.subr.mxu0 0.0
    %1008 = vmatpush2.msra.mxu0 0.0
    %1009 = vmatprep.subr.mxu0 0.0
    %1010 = vmatpush2.msra.mxu0 0.0
    %1011 = vmatprep.subr.mxu0 0.0
    %1012 = vmatpush2.msra.mxu0 0.0
    %1013 = vmatprep.subr.mxu0 0.0
    %1014 = vmatpush2.msra.mxu0 0.0
    %1015 = vmatprep.mubr.f32.mxu0 0.0
    %1016 = vmatmul.mubr.f32.gmra.mxu0 %v947
    %v1017 = vpop.f32.mrf.mxu0
    %v1018 = vadd.f32 0.0, %v1017
    %v1019 = vpop.f32.mrf.mxu0
    %v1020 = vadd.f32 0.0, %v1019
    %1021 = vdwg.mxu0
    %1022 = vmatprep.subr.mxu0 %v362
    %1023 = vmatpush1.msra.mxu0 %v361
    %1024 = vmatprep.subr.mxu0 %v358
    %1025 = vmatpush1.msra.mxu0 %v357
    %1026 = vmatprep.subr.mxu0 %v354
    %1027 = vmatpush1.msra.mxu0 %v353
    %1028 = vmatprep.subr.mxu0 %v350
    %1029 = vmatpush1.msra.mxu0 %v349
    %1030 = vmatprep.subr.mxu0 %v346
    %1031 = vmatpush1.msra.mxu0 %v345
    %1032 = vmatprep.subr.mxu0 %v342
    %1033 = vmatpush1.msra.mxu0 %v341
    %1034 = vmatprep.subr.mxu0 %v338
    %1035 = vmatpush1.msra.mxu0 %v337
    %1036 = vmatprep.subr.mxu0 %v334
    %1037 = vmatpush1.msra.mxu0 %v333
    %1038 = vmatprep.subr.mxu0 %v330
    %1039 = vmatpush1.msra.mxu0 %v329
    %1040 = vmatprep.subr.mxu0 %v326
    %1041 = vmatpush1.msra.mxu0 %v325
    %1042 = vmatprep.subr.mxu0 %v322
    %1043 = vmatpush1.msra.mxu0 %v321
    %1044 = vmatprep.subr.mxu0 %v318
    %1045 = vmatpush1.msra.mxu0 %v317
    %1046 = vmatprep.subr.mxu0 %v314
    %1047 = vmatpush1.msra.mxu0 %v313
    %1048 = vmatprep.subr.mxu0 %v310
    %1049 = vmatpush1.msra.mxu0 %v309
    %1050 = vmatprep.subr.mxu0 %v306
    %1051 = vmatpush1.msra.mxu0 %v305
    %1052 = vmatprep.subr.mxu0 %v302
    %1053 = vmatpush1.msra.mxu0 %v301
    %1054 = vmatprep.subr.mxu0 0.0
    %1055 = vmatpush2.msra.mxu0 0.0
    %1056 = vmatprep.subr.mxu0 0.0
    %1057 = vmatpush2.msra.mxu0 0.0
    %1058 = vmatprep.subr.mxu0 0.0
    %1059 = vmatpush2.msra.mxu0 0.0
    %1060 = vmatprep.subr.mxu0 0.0
    %1061 = vmatpush2.msra.mxu0 0.0
    %1062 = vmatprep.subr.mxu0 0.0
    %1063 = vmatpush2.msra.mxu0 0.0
    %1064 = vmatprep.subr.mxu0 0.0
    %1065 = vmatpush2.msra.mxu0 0.0
    %1066 = vmatprep.subr.mxu0 0.0
    %1067 = vmatpush2.msra.mxu0 0.0
    %1068 = vmatprep.subr.mxu0 0.0
    %1069 = vmatpush2.msra.mxu0 0.0
    %1070 = vmatprep.subr.mxu0 0.0
    %1071 = vmatpush2.msra.mxu0 0.0
    %1072 = vmatprep.subr.mxu0 0.0
    %1073 = vmatpush2.msra.mxu0 0.0
    %1074 = vmatprep.subr.mxu0 0.0
    %1075 = vmatpush2.msra.mxu0 0.0
    %1076 = vmatprep.subr.mxu0 0.0
    %1077 = vmatpush2.msra.mxu0 0.0
    %1078 = vmatprep.subr.mxu0 0.0
    %1079 = vmatpush2.msra.mxu0 0.0
    %1080 = vmatprep.subr.mxu0 0.0
    %1081 = vmatpush2.msra.mxu0 0.0
    %1082 = vmatprep.subr.mxu0 0.0
    %1083 = vmatpush2.msra.mxu0 0.0
    %1084 = vmatprep.subr.mxu0 0.0
    %1085 = vmatpush2.msra.mxu0 0.0
    %1086 = vmatprep.mubr.f32.mxu0 0.0
    %1087 = vmatmul.mubr.f32.gmra.mxu0 %v947
    %v1088 = vpop.f32.mrf.mxu0
    %v1089 = vadd.f32 0.0, %v1088
    %v1090 = vpop.f32.mrf.mxu0
    %v1091 = vadd.f32 0.0, %v1090
    %1092 = vdwg.mxu0
    %v1097 = vcombine.low %v1018, %v1020
    %v1098 = vcombine.low %v1089, %v1091
    %v1100 = vunpack.c.l.s4 1966171168
    %v1101 = vunpack.c.0.s8 %v1100
    %v1102 = vlaneseq
    %v1103 = vshrl.u32 %v1102, 7
    %v1104 = vsub.s32 %v1101, %v1103
    %v1105 = vrot.slane %v1097, %v1104
    %v1107 = vunpack.c.l.s4 1966171168
    %v1108 = vunpack.c.0.s8 %v1107
    %v1109 = vlaneseq
    %v1110 = vshrl.u32 %v1109, 7
    %v1111 = vsub.s32 %v1108, %v1110
    %v1112 = vrot.slane %v1098, %v1111
    %v1113 = vcombine.low %v1105, %v1112
    %v1115 = vunpack.c.l.s4 1966171168
    %v1116 = vunpack.c.0.s8 %v1115
    %v1117 = vlaneseq
    %v1118 = vshrl.u32 %v1117, 7
    %v1119 = vsub.s32 %v1116, %v1118
    %v1120 = vrot.slane %v1113, %v1119
    %v1122 = vadd.f32 %v950, %v1120
    %v1123 = vxor.u32 %v1122, 2147483648
    %v1124 = vmul.f32 %v1123, 1.442695
    %v1125 = vpow.pop %v1124
    %v1126 = vadd.f32 %v1125, 1.0
    %v1127 = vrcp.pop %v1126
    %v1128 = vmul.f32 1.0, %v1127
    %v1130 = vrot.slane %v1128, 2
    %v1132 = vmul.f32 %v1130, 2.0
    %v1133 = vsub.f32 %v1132, 1.0
    %v1134 = vrot.slane %v1128, 1
    %v1136 = vmul.f32 %v1134, %v943
    %v1137 = vmul.f32 %v1128, %v1133
    %v1138 = vadd.f32 %v1136, %v1137
    %v1139 = vtanh.pop %v1138
    %v1140 = vrot.slane %v1128, 3
    %v1142 = vmul.f32 %v1140, %v1139
    %1143 = vst [vmem:[#allocation3 + $0x3] sm:$0x1] %v1142
    %s1144 = scalar_lea.vmem [#allocation2], 4
    %v1145 = vld [vmem:[%s1144] ss:$8 sm:$0xf]
    %1146 = vmatprep.subr.mxu0 %v360
    %1147 = vmatpush1.msra.mxu0 %v359
    %1148 = vmatprep.subr.mxu0 %v356
    %1149 = vmatpush1.msra.mxu0 %v355
    %1150 = vmatprep.subr.mxu0 %v352
    %1151 = vmatpush1.msra.mxu0 %v351
    %1152 = vmatprep.subr.mxu0 %v348
    %1153 = vmatpush1.msra.mxu0 %v347
    %1154 = vmatprep.subr.mxu0 %v344
    %1155 = vmatpush1.msra.mxu0 %v343
    %1156 = vmatprep.subr.mxu0 %v340
    %1157 = vmatpush1.msra.mxu0 %v339
    %1158 = vmatprep.subr.mxu0 %v336
    %1159 = vmatpush1.msra.mxu0 %v335
    %1160 = vmatprep.subr.mxu0 %v332
    %1161 = vmatpush1.msra.mxu0 %v331
    %1162 = vmatprep.subr.mxu0 %v328
    %1163 = vmatpush1.msra.mxu0 %v327
    %1164 = vmatprep.subr.mxu0 %v324
    %1165 = vmatpush1.msra.mxu0 %v323
    %1166 = vmatprep.subr.mxu0 %v320
    %1167 = vmatpush1.msra.mxu0 %v319
    %1168 = vmatprep.subr.mxu0 %v316
    %1169 = vmatpush1.msra.mxu0 %v315
    %1170 = vmatprep.subr.mxu0 %v312
    %1171 = vmatpush1.msra.mxu0 %v311
    %1172 = vmatprep.subr.mxu0 %v308
    %1173 = vmatpush1.msra.mxu0 %v307
    %1174 = vmatprep.subr.mxu0 %v304
    %1175 = vmatpush1.msra.mxu0 %v303
    %1176 = vmatprep.subr.mxu0 %v300
    %1177 = vmatpush1.msra.mxu0 %v299
    %1178 = vmatprep.subr.mxu0 0.0
    %1179 = vmatpush2.msra.mxu0 0.0
    %1180 = vmatprep.subr.mxu0 0.0
    %1181 = vmatpush2.msra.mxu0 0.0
    %1182 = vmatprep.subr.mxu0 0.0
    %1183 = vmatpush2.msra.mxu0 0.0
    %1184 = vmatprep.subr.mxu0 0.0
    %1185 = vmatpush2.msra.mxu0 0.0
    %1186 = vmatprep.subr.mxu0 0.0
    %1187 = vmatpush2.msra.mxu0 0.0
    %1188 = vmatprep.subr.mxu0 0.0
    %1189 = vmatpush2.msra.mxu0 0.0
    %1190 = vmatprep.subr.mxu0 0.0
    %1191 = vmatpush2.msra.mxu0 0.0
    %1192 = vmatprep.subr.mxu0 0.0
    %1193 = vmatpush2.msra.mxu0 0.0
    %1194 = vmatprep.subr.mxu0 0.0
    %1195 = vmatpush2.msra.mxu0 0.0
    %1196 = vmatprep.subr.mxu0 0.0
    %1197 = vmatpush2.msra.mxu0 0.0
    %1198 = vmatprep.subr.mxu0 0.0
    %1199 = vmatpush2.msra.mxu0 0.0
    %1200 = vmatprep.subr.mxu0 0.0
    %1201 = vmatpush2.msra.mxu0 0.0
    %1202 = vmatprep.subr.mxu0 0.0
    %1203 = vmatpush2.msra.mxu0 0.0
    %1204 = vmatprep.subr.mxu0 0.0
    %1205 = vmatpush2.msra.mxu0 0.0
    %1206 = vmatprep.subr.mxu0 0.0
    %1207 = vmatpush2.msra.mxu0 0.0
    %1208 = vmatprep.subr.mxu0 0.0
    %1209 = vmatpush2.msra.mxu0 0.0
    %1210 = vmatprep.mubr.f32.mxu0 0.0
    %1211 = vmatmul.mubr.f32.gmra.mxu0 %v1142
    %v1212 = vpop.f32.mrf.mxu0
    %v1213 = vadd.f32 0.0, %v1212
    %v1214 = vpop.f32.mrf.mxu0
    %v1215 = vadd.f32 0.0, %v1214
    %1216 = vdwg.mxu0
    %1217 = vmatprep.subr.mxu0 %v362
    %1218 = vmatpush1.msra.mxu0 %v361
    %1219 = vmatprep.subr.mxu0 %v358
    %1220 = vmatpush1.msra.mxu0 %v357
    %1221 = vmatprep.subr.mxu0 %v354
    %1222 = vmatpush1.msra.mxu0 %v353
    %1223 = vmatprep.subr.mxu0 %v350
    %1224 = vmatpush1.msra.mxu0 %v349
    %1225 = vmatprep.subr.mxu0 %v346
    %1226 = vmatpush1.msra.mxu0 %v345
    %1227 = vmatprep.subr.mxu0 %v342
    %1228 = vmatpush1.msra.mxu0 %v341
    %1229 = vmatprep.subr.mxu0 %v338
    %1230 = vmatpush1.msra.mxu0 %v337
    %1231 = vmatprep.subr.mxu0 %v334
    %1232 = vmatpush1.msra.mxu0 %v333
    %1233 = vmatprep.subr.mxu0 %v330
    %1234 = vmatpush1.msra.mxu0 %v329
    %1235 = vmatprep.subr.mxu0 %v326
    %1236 = vmatpush1.msra.mxu0 %v325
    %1237 = vmatprep.subr.mxu0 %v322
    %1238 = vmatpush1.msra.mxu0 %v321
    %1239 = vmatprep.subr.mxu0 %v318
    %1240 = vmatpush1.msra.mxu0 %v317
    %1241 = vmatprep.subr.mxu0 %v314
    %1242 = vmatpush1.msra.mxu0 %v313
    %1243 = vmatprep.subr.mxu0 %v310
    %1244 = vmatpush1.msra.mxu0 %v309
    %1245 = vmatprep.subr.mxu0 %v306
    %1246 = vmatpush1.msra.mxu0 %v305
    %1247 = vmatprep.subr.mxu0 %v302
    %1248 = vmatpush1.msra.mxu0 %v301
    %1249 = vmatprep.subr.mxu0 0.0
    %1250 = vmatpush2.msra.mxu0 0.0
    %1251 = vmatprep.subr.mxu0 0.0
    %1252 = vmatpush2.msra.mxu0 0.0
    %1253 = vmatprep.subr.mxu0 0.0
    %1254 = vmatpush2.msra.mxu0 0.0
    %1255 = vmatprep.subr.mxu0 0.0
    %1256 = vmatpush2.msra.mxu0 0.0
    %1257 = vmatprep.subr.mxu0 0.0
    %1258 = vmatpush2.msra.mxu0 0.0
    %1259 = vmatprep.subr.mxu0 0.0
    %1260 = vmatpush2.msra.mxu0 0.0
    %1261 = vmatprep.subr.mxu0 0.0
    %1262 = vmatpush2.msra.mxu0 0.0
    %1263 = vmatprep.subr.mxu0 0.0
    %1264 = vmatpush2.msra.mxu0 0.0
    %1265 = vmatprep.subr.mxu0 0.0
    %1266 = vmatpush2.msra.mxu0 0.0
    %1267 = vmatprep.subr.mxu0 0.0
    %1268 = vmatpush2.msra.mxu0 0.0
    %1269 = vmatprep.subr.mxu0 0.0
    %1270 = vmatpush2.msra.mxu0 0.0
    %1271 = vmatprep.subr.mxu0 0.0
    %1272 = vmatpush2.msra.mxu0 0.0
    %1273 = vmatprep.subr.mxu0 0.0
    %1274 = vmatpush2.msra.mxu0 0.0
    %1275 = vmatprep.subr.mxu0 0.0
    %1276 = vmatpush2.msra.mxu0 0.0
    %1277 = vmatprep.subr.mxu0 0.0
    %1278 = vmatpush2.msra.mxu0 0.0
    %1279 = vmatprep.subr.mxu0 0.0
    %1280 = vmatpush2.msra.mxu0 0.0
    %1281 = vmatprep.mubr.f32.mxu0 0.0
    %1282 = vmatmul.mubr.f32.gmra.mxu0 %v1142
    %v1283 = vpop.f32.mrf.mxu0
    %v1284 = vadd.f32 0.0, %v1283
    %v1285 = vpop.f32.mrf.mxu0
    %v1286 = vadd.f32 0.0, %v1285
    %1287 = vdwg.mxu0
    %v1292 = vcombine.low %v1213, %v1215
    %v1293 = vcombine.low %v1284, %v1286
    %v1295 = vunpack.c.l.s4 1966171168
    %v1296 = vunpack.c.0.s8 %v1295
    %v1297 = vlaneseq
    %v1298 = vshrl.u32 %v1297, 7
    %v1299 = vsub.s32 %v1296, %v1298
    %v1300 = vrot.slane %v1292, %v1299
    %v1302 = vunpack.c.l.s4 1966171168
    %v1303 = vunpack.c.0.s8 %v1302
    %v1304 = vlaneseq
    %v1305 = vshrl.u32 %v1304, 7
    %v1306 = vsub.s32 %v1303, %v1305
    %v1307 = vrot.slane %v1293, %v1306
    %v1308 = vcombine.low %v1300, %v1307
    %v1310 = vunpack.c.l.s4 1966171168
    %v1311 = vunpack.c.0.s8 %v1310
    %v1312 = vlaneseq
    %v1313 = vshrl.u32 %v1312, 7
    %v1314 = vsub.s32 %v1311, %v1313
    %v1315 = vrot.slane %v1308, %v1314
    %v1317 = vadd.f32 %v1145, %v1315
    %v1318 = vxor.u32 %v1317, 2147483648
    %v1319 = vmul.f32 %v1318, 1.442695
    %v1320 = vpow.pop %v1319
    %v1321 = vadd.f32 %v1320, 1.0
    %v1322 = vrcp.pop %v1321
    %v1323 = vmul.f32 1.0, %v1322
    %v1325 = vrot.slane %v1323, 2
    %v1327 = vmul.f32 %v1325, 2.0
    %v1328 = vsub.f32 %v1327, 1.0
    %v1329 = vrot.slane %v1323, 1
    %v1331 = vmul.f32 %v1329, %v1138
    %v1332 = vmul.f32 %v1323, %v1328
    %v1333 = vadd.f32 %v1331, %v1332
    %v1334 = vtanh.pop %v1333
    %v1335 = vrot.slane %v1323, 3
    %v1337 = vmul.f32 %v1335, %v1334
    %1338 = vst [vmem:[#allocation3 + $0x4] sm:$0x1] %v1337
    %s1339 = scalar_lea.vmem [#allocation2], 5
    %v1340 = vld [vmem:[%s1339] ss:$8 sm:$0xf]
    %1341 = vmatprep.subr.mxu0 %v360
    %1342 = vmatpush1.msra.mxu0 %v359
    %1343 = vmatprep.subr.mxu0 %v356
    %1344 = vmatpush1.msra.mxu0 %v355
    %1345 = vmatprep.subr.mxu0 %v352
    %1346 = vmatpush1.msra.mxu0 %v351
    %1347 = vmatprep.subr.mxu0 %v348
    %1348 = vmatpush1.msra.mxu0 %v347
    %1349 = vmatprep.subr.mxu0 %v344
    %1350 = vmatpush1.msra.mxu0 %v343
    %1351 = vmatprep.subr.mxu0 %v340
    %1352 = vmatpush1.msra.mxu0 %v339
    %1353 = vmatprep.subr.mxu0 %v336
    %1354 = vmatpush1.msra.mxu0 %v335
    %1355 = vmatprep.subr.mxu0 %v332
    %1356 = vmatpush1.msra.mxu0 %v331
    %1357 = vmatprep.subr.mxu0 %v328
    %1358 = vmatpush1.msra.mxu0 %v327
    %1359 = vmatprep.subr.mxu0 %v324
    %1360 = vmatpush1.msra.mxu0 %v323
    %1361 = vmatprep.subr.mxu0 %v320
    %1362 = vmatpush1.msra.mxu0 %v319
    %1363 = vmatprep.subr.mxu0 %v316
    %1364 = vmatpush1.msra.mxu0 %v315
    %1365 = vmatprep.subr.mxu0 %v312
    %1366 = vmatpush1.msra.mxu0 %v311
    %1367 = vmatprep.subr.mxu0 %v308
    %1368 = vmatpush1.msra.mxu0 %v307
    %1369 = vmatprep.subr.mxu0 %v304
    %1370 = vmatpush1.msra.mxu0 %v303
    %1371 = vmatprep.subr.mxu0 %v300
    %1372 = vmatpush1.msra.mxu0 %v299
    %1373 = vmatprep.subr.mxu0 0.0
    %1374 = vmatpush2.msra.mxu0 0.0
    %1375 = vmatprep.subr.mxu0 0.0
    %1376 = vmatpush2.msra.mxu0 0.0
    %1377 = vmatprep.subr.mxu0 0.0
    %1378 = vmatpush2.msra.mxu0 0.0
    %1379 = vmatprep.subr.mxu0 0.0
    %1380 = vmatpush2.msra.mxu0 0.0
    %1381 = vmatprep.subr.mxu0 0.0
    %1382 = vmatpush2.msra.mxu0 0.0
    %1383 = vmatprep.subr.mxu0 0.0
    %1384 = vmatpush2.msra.mxu0 0.0
    %1385 = vmatprep.subr.mxu0 0.0
    %1386 = vmatpush2.msra.mxu0 0.0
    %1387 = vmatprep.subr.mxu0 0.0
    %1388 = vmatpush2.msra.mxu0 0.0
    %1389 = vmatprep.subr.mxu0 0.0
    %1390 = vmatpush2.msra.mxu0 0.0
    %1391 = vmatprep.subr.mxu0 0.0
    %1392 = vmatpush2.msra.mxu0 0.0
    %1393 = vmatprep.subr.mxu0 0.0
    %1394 = vmatpush2.msra.mxu0 0.0
    %1395 = vmatprep.subr.mxu0 0.0
    %1396 = vmatpush2.msra.mxu0 0.0
    %1397 = vmatprep.subr.mxu0 0.0
    %1398 = vmatpush2.msra.mxu0 0.0
    %1399 = vmatprep.subr.mxu0 0.0
    %1400 = vmatpush2.msra.mxu0 0.0
    %1401 = vmatprep.subr.mxu0 0.0
    %1402 = vmatpush2.msra.mxu0 0.0
    %1403 = vmatprep.subr.mxu0 0.0
    %1404 = vmatpush2.msra.mxu0 0.0
    %1405 = vmatprep.mubr.f32.mxu0 0.0
    %1406 = vmatmul.mubr.f32.gmra.mxu0 %v1337
    %v1407 = vpop.f32.mrf.mxu0
    %v1408 = vadd.f32 0.0, %v1407
    %v1409 = vpop.f32.mrf.mxu0
    %v1410 = vadd.f32 0.0, %v1409
    %1411 = vdwg.mxu0
    %1412 = vmatprep.subr.mxu0 %v362
    %1413 = vmatpush1.msra.mxu0 %v361
    %1414 = vmatprep.subr.mxu0 %v358
    %1415 = vmatpush1.msra.mxu0 %v357
    %1416 = vmatprep.subr.mxu0 %v354
    %1417 = vmatpush1.msra.mxu0 %v353
    %1418 = vmatprep.subr.mxu0 %v350
    %1419 = vmatpush1.msra.mxu0 %v349
    %1420 = vmatprep.subr.mxu0 %v346
    %1421 = vmatpush1.msra.mxu0 %v345
    %1422 = vmatprep.subr.mxu0 %v342
    %1423 = vmatpush1.msra.mxu0 %v341
    %1424 = vmatprep.subr.mxu0 %v338
    %1425 = vmatpush1.msra.mxu0 %v337
    %1426 = vmatprep.subr.mxu0 %v334
    %1427 = vmatpush1.msra.mxu0 %v333
    %1428 = vmatprep.subr.mxu0 %v330
    %1429 = vmatpush1.msra.mxu0 %v329
    %1430 = vmatprep.subr.mxu0 %v326
    %1431 = vmatpush1.msra.mxu0 %v325
    %1432 = vmatprep.subr.mxu0 %v322
    %1433 = vmatpush1.msra.mxu0 %v321
    %1434 = vmatprep.subr.mxu0 %v318
    %1435 = vmatpush1.msra.mxu0 %v317
    %1436 = vmatprep.subr.mxu0 %v314
    %1437 = vmatpush1.msra.mxu0 %v313
    %1438 = vmatprep.subr.mxu0 %v310
    %1439 = vmatpush1.msra.mxu0 %v309
    %1440 = vmatprep.subr.mxu0 %v306
    %1441 = vmatpush1.msra.mxu0 %v305
    %1442 = vmatprep.subr.mxu0 %v302
    %1443 = vmatpush1.msra.mxu0 %v301
    %1444 = vmatprep.subr.mxu0 0.0
    %1445 = vmatpush2.msra.mxu0 0.0
    %1446 = vmatprep.subr.mxu0 0.0
    %1447 = vmatpush2.msra.mxu0 0.0
    %1448 = vmatprep.subr.mxu0 0.0
    %1449 = vmatpush2.msra.mxu0 0.0
    %1450 = vmatprep.subr.mxu0 0.0
    %1451 = vmatpush2.msra.mxu0 0.0
    %1452 = vmatprep.subr.mxu0 0.0
    %1453 = vmatpush2.msra.mxu0 0.0
    %1454 = vmatprep.subr.mxu0 0.0
    %1455 = vmatpush2.msra.mxu0 0.0
    %1456 = vmatprep.subr.mxu0 0.0
    %1457 = vmatpush2.msra.mxu0 0.0
    %1458 = vmatprep.subr.mxu0 0.0
    %1459 = vmatpush2.msra.mxu0 0.0
    %1460 = vmatprep.subr.mxu0 0.0
    %1461 = vmatpush2.msra.mxu0 0.0
    %1462 = vmatprep.subr.mxu0 0.0
    %1463 = vmatpush2.msra.mxu0 0.0
    %1464 = vmatprep.subr.mxu0 0.0
    %1465 = vmatpush2.msra.mxu0 0.0
    %1466 = vmatprep.subr.mxu0 0.0
    %1467 = vmatpush2.msra.mxu0 0.0
    %1468 = vmatprep.subr.mxu0 0.0
    %1469 = vmatpush2.msra.mxu0 0.0
    %1470 = vmatprep.subr.mxu0 0.0
    %1471 = vmatpush2.msra.mxu0 0.0
    %1472 = vmatprep.subr.mxu0 0.0
    %1473 = vmatpush2.msra.mxu0 0.0
    %1474 = vmatprep.subr.mxu0 0.0
    %1475 = vmatpush2.msra.mxu0 0.0
    %1476 = vmatprep.mubr.f32.mxu0 0.0
    %1477 = vmatmul.mubr.f32.gmra.mxu0 %v1337
    %v1478 = vpop.f32.mrf.mxu0
    %v1479 = vadd.f32 0.0, %v1478
    %v1480 = vpop.f32.mrf.mxu0
    %v1481 = vadd.f32 0.0, %v1480
    %1482 = vdwg.mxu0
    %v1487 = vcombine.low %v1408, %v1410
    %v1488 = vcombine.low %v1479, %v1481
    %v1490 = vunpack.c.l.s4 1966171168
    %v1491 = vunpack.c.0.s8 %v1490
    %v1492 = vlaneseq
    %v1493 = vshrl.u32 %v1492, 7
    %v1494 = vsub.s32 %v1491, %v1493
    %v1495 = vrot.slane %v1487, %v1494
    %v1497 = vunpack.c.l.s4 1966171168
    %v1498 = vunpack.c.0.s8 %v1497
    %v1499 = vlaneseq
    %v1500 = vshrl.u32 %v1499, 7
    %v1501 = vsub.s32 %v1498, %v1500
    %v1502 = vrot.slane %v1488, %v1501
    %v1503 = vcombine.low %v1495, %v1502
    %v1505 = vunpack.c.l.s4 1966171168
    %v1506 = vunpack.c.0.s8 %v1505
    %v1507 = vlaneseq
    %v1508 = vshrl.u32 %v1507, 7
    %v1509 = vsub.s32 %v1506, %v1508
    %v1510 = vrot.slane %v1503, %v1509
    %v1512 = vadd.f32 %v1340, %v1510
    %v1513 = vxor.u32 %v1512, 2147483648
    %v1514 = vmul.f32 %v1513, 1.442695
    %v1515 = vpow.pop %v1514
    %v1516 = vadd.f32 %v1515, 1.0
    %v1517 = vrcp.pop %v1516
    %v1518 = vmul.f32 1.0, %v1517
    %v1520 = vrot.slane %v1518, 2
    %v1522 = vmul.f32 %v1520, 2.0
    %v1523 = vsub.f32 %v1522, 1.0
    %v1524 = vrot.slane %v1518, 1
    %v1526 = vmul.f32 %v1524, %v1333
    %v1527 = vmul.f32 %v1518, %v1523
    %v1528 = vadd.f32 %v1526, %v1527
    %v1529 = vtanh.pop %v1528
    %v1530 = vrot.slane %v1518, 3
    %v1532 = vmul.f32 %v1530, %v1529
    %1533 = vst [vmem:[#allocation3 + $0x5] sm:$0x1] %v1532
    %s1534 = scalar_lea.vmem [#allocation2], 6
    %v1535 = vld [vmem:[%s1534] ss:$8 sm:$0xf]
    %1536 = vmatprep.subr.mxu0 %v360
    %1537 = vmatpush1.msra.mxu0 %v359
    %1538 = vmatprep.subr.mxu0 %v356
    %1539 = vmatpush1.msra.mxu0 %v355
    %1540 = vmatprep.subr.mxu0 %v352
    %1541 = vmatpush1.msra.mxu0 %v351
    %1542 = vmatprep.subr.mxu0 %v348
    %1543 = vmatpush1.msra.mxu0 %v347
    %1544 = vmatprep.subr.mxu0 %v344
    %1545 = vmatpush1.msra.mxu0 %v343
    %1546 = vmatprep.subr.mxu0 %v340
    %1547 = vmatpush1.msra.mxu0 %v339
    %1548 = vmatprep.subr.mxu0 %v336
    %1549 = vmatpush1.msra.mxu0 %v335
    %1550 = vmatprep.subr.mxu0 %v332
    %1551 = vmatpush1.msra.mxu0 %v331
    %1552 = vmatprep.subr.mxu0 %v328
    %1553 = vmatpush1.msra.mxu0 %v327
    %1554 = vmatprep.subr.mxu0 %v324
    %1555 = vmatpush1.msra.mxu0 %v323
    %1556 = vmatprep.subr.mxu0 %v320
    %1557 = vmatpush1.msra.mxu0 %v319
    %1558 = vmatprep.subr.mxu0 %v316
    %1559 = vmatpush1.msra.mxu0 %v315
    %1560 = vmatprep.subr.mxu0 %v312
    %1561 = vmatpush1.msra.mxu0 %v311
    %1562 = vmatprep.subr.mxu0 %v308
    %1563 = vmatpush1.msra.mxu0 %v307
    %1564 = vmatprep.subr.mxu0 %v304
    %1565 = vmatpush1.msra.mxu0 %v303
    %1566 = vmatprep.subr.mxu0 %v300
    %1567 = vmatpush1.msra.mxu0 %v299
    %1568 = vmatprep.subr.mxu0 0.0
    %1569 = vmatpush2.msra.mxu0 0.0
    %1570 = vmatprep.subr.mxu0 0.0
    %1571 = vmatpush2.msra.mxu0 0.0
    %1572 = vmatprep.subr.mxu0 0.0
    %1573 = vmatpush2.msra.mxu0 0.0
    %1574 = vmatprep.subr.mxu0 0.0
    %1575 = vmatpush2.msra.mxu0 0.0
    %1576 = vmatprep.subr.mxu0 0.0
    %1577 = vmatpush2.msra.mxu0 0.0
    %1578 = vmatprep.subr.mxu0 0.0
    %1579 = vmatpush2.msra.mxu0 0.0
    %1580 = vmatprep.subr.mxu0 0.0
    %1581 = vmatpush2.msra.mxu0 0.0
    %1582 = vmatprep.subr.mxu0 0.0
    %1583 = vmatpush2.msra.mxu0 0.0
    %1584 = vmatprep.subr.mxu0 0.0
    %1585 = vmatpush2.msra.mxu0 0.0
    %1586 = vmatprep.subr.mxu0 0.0
    %1587 = vmatpush2.msra.mxu0 0.0
    %1588 = vmatprep.subr.mxu0 0.0
    %1589 = vmatpush2.msra.mxu0 0.0
    %1590 = vmatprep.subr.mxu0 0.0
    %1591 = vmatpush2.msra.mxu0 0.0
    %1592 = vmatprep.subr.mxu0 0.0
    %1593 = vmatpush2.msra.mxu0 0.0
    %1594 = vmatprep.subr.mxu0 0.0
    %1595 = vmatpush2.msra.mxu0 0.0
    %1596 = vmatprep.subr.mxu0 0.0
    %1597 = vmatpush2.msra.mxu0 0.0
    %1598 = vmatprep.subr.mxu0 0.0
    %1599 = vmatpush2.msra.mxu0 0.0
    %1600 = vmatprep.mubr.f32.mxu0 0.0
    %1601 = vmatmul.mubr.f32.gmra.mxu0 %v1532
    %v1602 = vpop.f32.mrf.mxu0
    %v1603 = vadd.f32 0.0, %v1602
    %v1604 = vpop.f32.mrf.mxu0
    %v1605 = vadd.f32 0.0, %v1604
    %1606 = vdwg.mxu0
    %1607 = vmatprep.subr.mxu0 %v362
    %1608 = vmatpush1.msra.mxu0 %v361
    %1609 = vmatprep.subr.mxu0 %v358
    %1610 = vmatpush1.msra.mxu0 %v357
    %1611 = vmatprep.subr.mxu0 %v354
    %1612 = vmatpush1.msra.mxu0 %v353
    %1613 = vmatprep.subr.mxu0 %v350
    %1614 = vmatpush1.msra.mxu0 %v349
    %1615 = vmatprep.subr.mxu0 %v346
    %1616 = vmatpush1.msra.mxu0 %v345
    %1617 = vmatprep.subr.mxu0 %v342
    %1618 = vmatpush1.msra.mxu0 %v341
    %1619 = vmatprep.subr.mxu0 %v338
    %1620 = vmatpush1.msra.mxu0 %v337
    %1621 = vmatprep.subr.mxu0 %v334
    %1622 = vmatpush1.msra.mxu0 %v333
    %1623 = vmatprep.subr.mxu0 %v330
    %1624 = vmatpush1.msra.mxu0 %v329
    %1625 = vmatprep.subr.mxu0 %v326
    %1626 = vmatpush1.msra.mxu0 %v325
    %1627 = vmatprep.subr.mxu0 %v322
    %1628 = vmatpush1.msra.mxu0 %v321
    %1629 = vmatprep.subr.mxu0 %v318
    %1630 = vmatpush1.msra.mxu0 %v317
    %1631 = vmatprep.subr.mxu0 %v314
    %1632 = vmatpush1.msra.mxu0 %v313
    %1633 = vmatprep.subr.mxu0 %v310
    %1634 = vmatpush1.msra.mxu0 %v309
    %1635 = vmatprep.subr.mxu0 %v306
    %1636 = vmatpush1.msra.mxu0 %v305
    %1637 = vmatprep.subr.mxu0 %v302
    %1638 = vmatpush1.msra.mxu0 %v301
    %1639 = vmatprep.subr.mxu0 0.0
    %1640 = vmatpush2.msra.mxu0 0.0
    %1641 = vmatprep.subr.mxu0 0.0
    %1642 = vmatpush2.msra.mxu0 0.0
    %1643 = vmatprep.subr.mxu0 0.0
    %1644 = vmatpush2.msra.mxu0 0.0
    %1645 = vmatprep.subr.mxu0 0.0
    %1646 = vmatpush2.msra.mxu0 0.0
    %1647 = vmatprep.subr.mxu0 0.0
    %1648 = vmatpush2.msra.mxu0 0.0
    %1649 = vmatprep.subr.mxu0 0.0
    %1650 = vmatpush2.msra.mxu0 0.0
    %1651 = vmatprep.subr.mxu0 0.0
    %1652 = vmatpush2.msra.mxu0 0.0
    %1653 = vmatprep.subr.mxu0 0.0
    %1654 = vmatpush2.msra.mxu0 0.0
    %1655 = vmatprep.subr.mxu0 0.0
    %1656 = vmatpush2.msra.mxu0 0.0
    %1657 = vmatprep.subr.mxu0 0.0
    %1658 = vmatpush2.msra.mxu0 0.0
    %1659 = vmatprep.subr.mxu0 0.0
    %1660 = vmatpush2.msra.mxu0 0.0
    %1661 = vmatprep.subr.mxu0 0.0
    %1662 = vmatpush2.msra.mxu0 0.0
    %1663 = vmatprep.subr.mxu0 0.0
    %1664 = vmatpush2.msra.mxu0 0.0
    %1665 = vmatprep.subr.mxu0 0.0
    %1666 = vmatpush2.msra.mxu0 0.0
    %1667 = vmatprep.subr.mxu0 0.0
    %1668 = vmatpush2.msra.mxu0 0.0
    %1669 = vmatprep.subr.mxu0 0.0
    %1670 = vmatpush2.msra.mxu0 0.0
    %1671 = vmatprep.mubr.f32.mxu0 0.0
    %1672 = vmatmul.mubr.f32.gmra.mxu0 %v1532
    %v1673 = vpop.f32.mrf.mxu0
    %v1674 = vadd.f32 0.0, %v1673
    %v1675 = vpop.f32.mrf.mxu0
    %v1676 = vadd.f32 0.0, %v1675
    %1677 = vdwg.mxu0
    %v1682 = vcombine.low %v1603, %v1605
    %v1683 = vcombine.low %v1674, %v1676
    %v1685 = vunpack.c.l.s4 1966171168
    %v1686 = vunpack.c.0.s8 %v1685
    %v1687 = vlaneseq
    %v1688 = vshrl.u32 %v1687, 7
    %v1689 = vsub.s32 %v1686, %v1688
    %v1690 = vrot.slane %v1682, %v1689
    %v1692 = vunpack.c.l.s4 1966171168
    %v1693 = vunpack.c.0.s8 %v1692
    %v1694 = vlaneseq
    %v1695 = vshrl.u32 %v1694, 7
    %v1696 = vsub.s32 %v1693, %v1695
    %v1697 = vrot.slane %v1683, %v1696
    %v1698 = vcombine.low %v1690, %v1697
    %v1700 = vunpack.c.l.s4 1966171168
    %v1701 = vunpack.c.0.s8 %v1700
    %v1702 = vlaneseq
    %v1703 = vshrl.u32 %v1702, 7
    %v1704 = vsub.s32 %v1701, %v1703
    %v1705 = vrot.slane %v1698, %v1704
    %v1707 = vadd.f32 %v1535, %v1705
    %v1708 = vxor.u32 %v1707, 2147483648
    %v1709 = vmul.f32 %v1708, 1.442695
    %v1710 = vpow.pop %v1709
    %v1711 = vadd.f32 %v1710, 1.0
    %v1712 = vrcp.pop %v1711
    %v1713 = vmul.f32 1.0, %v1712
    %v1715 = vrot.slane %v1713, 2
    %v1717 = vmul.f32 %v1715, 2.0
    %v1718 = vsub.f32 %v1717, 1.0
    %v1719 = vrot.slane %v1713, 1
    %v1721 = vmul.f32 %v1719, %v1528
    %v1722 = vmul.f32 %v1713, %v1718
    %v1723 = vadd.f32 %v1721, %v1722
    %v1724 = vtanh.pop %v1723
    %v1725 = vrot.slane %v1713, 3
    %v1727 = vmul.f32 %v1725, %v1724
    %1728 = vst [vmem:[#allocation3 + $0x6] sm:$0x1] %v1727
    %s1729 = scalar_lea.vmem [#allocation2], 7
    %v1730 = vld [vmem:[%s1729] ss:$8 sm:$0xf]
    %1731 = vmatprep.subr.mxu0 %v360
    %1732 = vmatpush1.msra.mxu0 %v359
    %1733 = vmatprep.subr.mxu0 %v356
    %1734 = vmatpush1.msra.mxu0 %v355
    %1735 = vmatprep.subr.mxu0 %v352
    %1736 = vmatpush1.msra.mxu0 %v351
    %1737 = vmatprep.subr.mxu0 %v348
    %1738 = vmatpush1.msra.mxu0 %v347
    %1739 = vmatprep.subr.mxu0 %v344
    %1740 = vmatpush1.msra.mxu0 %v343
    %1741 = vmatprep.subr.mxu0 %v340
    %1742 = vmatpush1.msra.mxu0 %v339
    %1743 = vmatprep.subr.mxu0 %v336
    %1744 = vmatpush1.msra.mxu0 %v335
    %1745 = vmatprep.subr.mxu0 %v332
    %1746 = vmatpush1.msra.mxu0 %v331
    %1747 = vmatprep.subr.mxu0 %v328
    %1748 = vmatpush1.msra.mxu0 %v327
    %1749 = vmatprep.subr.mxu0 %v324
    %1750 = vmatpush1.msra.mxu0 %v323
    %1751 = vmatprep.subr.mxu0 %v320
    %1752 = vmatpush1.msra.mxu0 %v319
    %1753 = vmatprep.subr.mxu0 %v316
    %1754 = vmatpush1.msra.mxu0 %v315
    %1755 = vmatprep.subr.mxu0 %v312
    %1756 = vmatpush1.msra.mxu0 %v311
    %1757 = vmatprep.subr.mxu0 %v308
    %1758 = vmatpush1.msra.mxu0 %v307
    %1759 = vmatprep.subr.mxu0 %v304
    %1760 = vmatpush1.msra.mxu0 %v303
    %1761 = vmatprep.subr.mxu0 %v300
    %1762 = vmatpush1.msra.mxu0 %v299
    %1763 = vmatprep.subr.mxu0 0.0
    %1764 = vmatpush2.msra.mxu0 0.0
    %1765 = vmatprep.subr.mxu0 0.0
    %1766 = vmatpush2.msra.mxu0 0.0
    %1767 = vmatprep.subr.mxu0 0.0
    %1768 = vmatpush2.msra.mxu0 0.0
    %1769 = vmatprep.subr.mxu0 0.0
    %1770 = vmatpush2.msra.mxu0 0.0
    %1771 = vmatprep.subr.mxu0 0.0
    %1772 = vmatpush2.msra.mxu0 0.0
    %1773 = vmatprep.subr.mxu0 0.0
    %1774 = vmatpush2.msra.mxu0 0.0
    %1775 = vmatprep.subr.mxu0 0.0
    %1776 = vmatpush2.msra.mxu0 0.0
    %1777 = vmatprep.subr.mxu0 0.0
    %1778 = vmatpush2.msra.mxu0 0.0
    %1779 = vmatprep.subr.mxu0 0.0
    %1780 = vmatpush2.msra.mxu0 0.0
    %1781 = vmatprep.subr.mxu0 0.0
    %1782 = vmatpush2.msra.mxu0 0.0
    %1783 = vmatprep.subr.mxu0 0.0
    %1784 = vmatpush2.msra.mxu0 0.0
    %1785 = vmatprep.subr.mxu0 0.0
    %1786 = vmatpush2.msra.mxu0 0.0
    %1787 = vmatprep.subr.mxu0 0.0
    %1788 = vmatpush2.msra.mxu0 0.0
    %1789 = vmatprep.subr.mxu0 0.0
    %1790 = vmatpush2.msra.mxu0 0.0
    %1791 = vmatprep.subr.mxu0 0.0
    %1792 = vmatpush2.msra.mxu0 0.0
    %1793 = vmatprep.subr.mxu0 0.0
    %1794 = vmatpush2.msra.mxu0 0.0
    %1795 = vmatprep.mubr.f32.mxu0 0.0
    %1796 = vmatmul.mubr.f32.gmra.mxu0 %v1727
    %v1797 = vpop.f32.mrf.mxu0
    %v1798 = vadd.f32 0.0, %v1797
    %v1799 = vpop.f32.mrf.mxu0
    %v1800 = vadd.f32 0.0, %v1799
    %1801 = vdwg.mxu0
    %1802 = vmatprep.subr.mxu0 %v362
    %1803 = vmatpush1.msra.mxu0 %v361
    %1804 = vmatprep.subr.mxu0 %v358
    %1805 = vmatpush1.msra.mxu0 %v357
    %1806 = vmatprep.subr.mxu0 %v354
    %1807 = vmatpush1.msra.mxu0 %v353
    %1808 = vmatprep.subr.mxu0 %v350
    %1809 = vmatpush1.msra.mxu0 %v349
    %1810 = vmatprep.subr.mxu0 %v346
    %1811 = vmatpush1.msra.mxu0 %v345
    %1812 = vmatprep.subr.mxu0 %v342
    %1813 = vmatpush1.msra.mxu0 %v341
    %1814 = vmatprep.subr.mxu0 %v338
    %1815 = vmatpush1.msra.mxu0 %v337
    %1816 = vmatprep.subr.mxu0 %v334
    %1817 = vmatpush1.msra.mxu0 %v333
    %1818 = vmatprep.subr.mxu0 %v330
    %1819 = vmatpush1.msra.mxu0 %v329
    %1820 = vmatprep.subr.mxu0 %v326
    %1821 = vmatpush1.msra.mxu0 %v325
    %1822 = vmatprep.subr.mxu0 %v322
    %1823 = vmatpush1.msra.mxu0 %v321
    %1824 = vmatprep.subr.mxu0 %v318
    %1825 = vmatpush1.msra.mxu0 %v317
    %1826 = vmatprep.subr.mxu0 %v314
    %1827 = vmatpush1.msra.mxu0 %v313
    %1828 = vmatprep.subr.mxu0 %v310
    %1829 = vmatpush1.msra.mxu0 %v309
    %1830 = vmatprep.subr.mxu0 %v306
    %1831 = vmatpush1.msra.mxu0 %v305
    %1832 = vmatprep.subr.mxu0 %v302
    %1833 = vmatpush1.msra.mxu0 %v301
    %1834 = vmatprep.subr.mxu0 0.0
    %1835 = vmatpush2.msra.mxu0 0.0
    %1836 = vmatprep.subr.mxu0 0.0
    %1837 = vmatpush2.msra.mxu0 0.0
    %1838 = vmatprep.subr.mxu0 0.0
    %1839 = vmatpush2.msra.mxu0 0.0
    %1840 = vmatprep.subr.mxu0 0.0
    %1841 = vmatpush2.msra.mxu0 0.0
    %1842 = vmatprep.subr.mxu0 0.0
    %1843 = vmatpush2.msra.mxu0 0.0
    %1844 = vmatprep.subr.mxu0 0.0
    %1845 = vmatpush2.msra.mxu0 0.0
    %1846 = vmatprep.subr.mxu0 0.0
    %1847 = vmatpush2.msra.mxu0 0.0
    %1848 = vmatprep.subr.mxu0 0.0
    %1849 = vmatpush2.msra.mxu0 0.0
    %1850 = vmatprep.subr.mxu0 0.0
    %1851 = vmatpush2.msra.mxu0 0.0
    %1852 = vmatprep.subr.mxu0 0.0
    %1853 = vmatpush2.msra.mxu0 0.0
    %1854 = vmatprep.subr.mxu0 0.0
    %1855 = vmatpush2.msra.mxu0 0.0
    %1856 = vmatprep.subr.mxu0 0.0
    %1857 = vmatpush2.msra.mxu0 0.0
    %1858 = vmatprep.subr.mxu0 0.0
    %1859 = vmatpush2.msra.mxu0 0.0
    %1860 = vmatprep.subr.mxu0 0.0
    %1861 = vmatpush2.msra.mxu0 0.0
    %1862 = vmatprep.subr.mxu0 0.0
    %1863 = vmatpush2.msra.mxu0 0.0
    %1864 = vmatprep.subr.mxu0 0.0
    %1865 = vmatpush2.msra.mxu0 0.0
    %1866 = vmatprep.mubr.f32.mxu0 0.0
    %1867 = vmatmul.mubr.f32.gmra.mxu0 %v1727
    %v1868 = vpop.f32.mrf.mxu0
    %v1869 = vadd.f32 0.0, %v1868
    %v1870 = vpop.f32.mrf.mxu0
    %v1871 = vadd.f32 0.0, %v1870
    %1872 = vdwg.mxu0
    %v1877 = vcombine.low %v1798, %v1800
    %v1878 = vcombine.low %v1869, %v1871
    %v1880 = vunpack.c.l.s4 1966171168
    %v1881 = vunpack.c.0.s8 %v1880
    %v1882 = vlaneseq
    %v1883 = vshrl.u32 %v1882, 7
    %v1884 = vsub.s32 %v1881, %v1883
    %v1885 = vrot.slane %v1877, %v1884
    %v1887 = vunpack.c.l.s4 1966171168
    %v1888 = vunpack.c.0.s8 %v1887
    %v1889 = vlaneseq
    %v1890 = vshrl.u32 %v1889, 7
    %v1891 = vsub.s32 %v1888, %v1890
    %v1892 = vrot.slane %v1878, %v1891
    %v1893 = vcombine.low %v1885, %v1892
    %v1895 = vunpack.c.l.s4 1966171168
    %v1896 = vunpack.c.0.s8 %v1895
    %v1897 = vlaneseq
    %v1898 = vshrl.u32 %v1897, 7
    %v1899 = vsub.s32 %v1896, %v1898
    %v1900 = vrot.slane %v1893, %v1899
    %v1902 = vadd.f32 %v1730, %v1900
    %v1903 = vxor.u32 %v1902, 2147483648
    %v1904 = vmul.f32 %v1903, 1.442695
    %v1905 = vpow.pop %v1904
    %v1906 = vadd.f32 %v1905, 1.0
    %v1907 = vrcp.pop %v1906
    %v1908 = vmul.f32 1.0, %v1907
    %v1910 = vrot.slane %v1908, 2
    %v1912 = vmul.f32 %v1910, 2.0
    %v1913 = vsub.f32 %v1912, 1.0
    %v1914 = vrot.slane %v1908, 1
    %v1916 = vmul.f32 %v1914, %v1723
    %v1917 = vmul.f32 %v1908, %v1913
    %v1918 = vadd.f32 %v1916, %v1917
    %v1919 = vtanh.pop %v1918
    %v1920 = vrot.slane %v1908, 3
    %v1922 = vmul.f32 %v1920, %v1919
    %1923 = vst [vmem:[#allocation3 + $0x7] sm:$0x1] %v1922
    %1924 = vst [vmem:[#allocation4] sm:$0x1] %v1922
    %1925 = vst [vmem:[#allocation5] sm:$0x1] %v1918
    %v1926 = vld [vmem:[#allocation3] sm:$0xff]
    %v1927 = vld [vmem:[#allocation14] sm:$0xff]
    %v1928 = vld [vmem:[#allocation14 + $0x8] sm:$0xff]
    %v1929 = vld [vmem:[#allocation14 + $0x10] sm:$0xff]
    %v1930 = vld [vmem:[#allocation14 + $0x18] sm:$0xff]
    %v1931 = vld [vmem:[#allocation14 + $0x20] sm:$0xff]
    %v1932 = vld [vmem:[#allocation14 + $0x28] sm:$0xff]
    %v1933 = vld [vmem:[#allocation14 + $0x30] sm:$0xff]
    %v1934 = vld [vmem:[#allocation14 + $0x38] sm:$0xff]
    %v1935 = vld [vmem:[#allocation14 + $0x40] sm:$0xff]
    %v1936 = vld [vmem:[#allocation14 + $0x48] sm:$0xff]
    %v1937 = vld [vmem:[#allocation14 + $0x50] sm:$0xff]
    %v1938 = vld [vmem:[#allocation14 + $0x58] sm:$0xff]
    %v1939 = vld [vmem:[#allocation14 + $0x60] sm:$0xff]
    %v1940 = vld [vmem:[#allocation14 + $0x68] sm:$0xff]
    %v1941 = vld [vmem:[#allocation14 + $0x70] sm:$0xff]
    %v1942 = vld [vmem:[#allocation14 + $0x78] sm:$0xff]
    %v1943 = vld [vmem:[%s5] sm:$0x1]
    %v1945 = vlaneseq
    %v1946 = vshrl.u32 %v1945, 7
    %v1947 = vsub.s32 0, %v1946
    %v1948 = vrot.slane %v1943, %v1947
    %1950 = vmatprep.subr.mxu0 0.0
    %1951 = vmatpush1.msra.mxu0 %v1942
    %1952 = vmatprep.subr.mxu0 0.0
    %1953 = vmatpush1.msra.mxu0 %v1941
    %1954 = vmatprep.subr.mxu0 0.0
    %1955 = vmatpush1.msra.mxu0 %v1940
    %1956 = vmatprep.subr.mxu0 0.0
    %1957 = vmatpush1.msra.mxu0 %v1939
    %1958 = vmatprep.subr.mxu0 0.0
    %1959 = vmatpush1.msra.mxu0 %v1938
    %1960 = vmatprep.subr.mxu0 0.0
    %1961 = vmatpush1.msra.mxu0 %v1937
    %1962 = vmatprep.subr.mxu0 0.0
    %1963 = vmatpush1.msra.mxu0 %v1936
    %1964 = vmatprep.subr.mxu0 0.0
    %1965 = vmatpush1.msra.mxu0 %v1935
    %1966 = vmatprep.subr.mxu0 0.0
    %1967 = vmatpush1.msra.mxu0 %v1934
    %1968 = vmatprep.subr.mxu0 0.0
    %1969 = vmatpush1.msra.mxu0 %v1933
    %1970 = vmatprep.subr.mxu0 0.0
    %1971 = vmatpush1.msra.mxu0 %v1932
    %1972 = vmatprep.subr.mxu0 0.0
    %1973 = vmatpush1.msra.mxu0 %v1931
    %1974 = vmatprep.subr.mxu0 0.0
    %1975 = vmatpush1.msra.mxu0 %v1930
    %1976 = vmatprep.subr.mxu0 0.0
    %1977 = vmatpush1.msra.mxu0 %v1929
    %1978 = vmatprep.subr.mxu0 0.0
    %1979 = vmatpush1.msra.mxu0 %v1928
    %1980 = vmatprep.subr.mxu0 0.0
    %1981 = vmatpush1.msra.mxu0 %v1927
    %1982 = vmatprep.subr.mxu0 0.0
    %1983 = vmatpush2.msra.mxu0 0.0
    %1984 = vmatprep.subr.mxu0 0.0
    %1985 = vmatpush2.msra.mxu0 0.0
    %1986 = vmatprep.subr.mxu0 0.0
    %1987 = vmatpush2.msra.mxu0 0.0
    %1988 = vmatprep.subr.mxu0 0.0
    %1989 = vmatpush2.msra.mxu0 0.0
    %1990 = vmatprep.subr.mxu0 0.0
    %1991 = vmatpush2.msra.mxu0 0.0
    %1992 = vmatprep.subr.mxu0 0.0
    %1993 = vmatpush2.msra.mxu0 0.0
    %1994 = vmatprep.subr.mxu0 0.0
    %1995 = vmatpush2.msra.mxu0 0.0
    %1996 = vmatprep.subr.mxu0 0.0
    %1997 = vmatpush2.msra.mxu0 0.0
    %1998 = vmatprep.subr.mxu0 0.0
    %1999 = vmatpush2.msra.mxu0 0.0
    %2000 = vmatprep.subr.mxu0 0.0
    %2001 = vmatpush2.msra.mxu0 0.0
    %2002 = vmatprep.subr.mxu0 0.0
    %2003 = vmatpush2.msra.mxu0 0.0
    %2004 = vmatprep.subr.mxu0 0.0
    %2005 = vmatpush2.msra.mxu0 0.0
    %2006 = vmatprep.subr.mxu0 0.0
    %2007 = vmatpush2.msra.mxu0 0.0
    %2008 = vmatprep.subr.mxu0 0.0
    %2009 = vmatpush2.msra.mxu0 0.0
    %2010 = vmatprep.subr.mxu0 0.0
    %2011 = vmatpush2.msra.mxu0 0.0
    %2012 = vmatprep.subr.mxu0 0.0
    %2013 = vmatpush2.msra.mxu0 0.0
    %2014 = vmatprep.mubr.f32.mxu0 0.0
    %2015 = vmatmul.mubr.f32.gmra.mxu0 %v1926
    %v2016 = vpop.f32.mrf.mxu0
    %v2017 = vadd.f32 %v1948, %v2016
    %v2018 = vpop.f32.mrf.mxu0
    %2019 = vdwg.mxu0
    %v2020 = vxor.u32 %v2017, 2147483648
    %v2021 = vmul.f32 %v2020, 1.442695
    %v2022 = vpow.pop %v2021
    %v2023 = vadd.f32 %v2022, 1.0
    %v2024 = vrcp.pop %v2023
    %v2025 = vmul.f32 1.0, %v2024
    %2026 = vst [vmem:[#allocation15] sm:$0xff] %v2025
    // Predicated region
    $region58: #{tpu_custom_call.1} parent=1 // pred_check
      _
    $region59: #{tpu_custom_call.1} parent=1 // pred_check_branch
      %2028 = sbr.rel (0) target = $region61
    $region60: #{tpu_custom_call.1} parent=1 // pred_region
      %s2030 = ssub.s32 128, 128
      %2031 = vsyncadd [#allocation8], %s2030
      %s2033 = sshll.u32 [#allocation15], 4
      %s2034 = int_to_ptr.vmem [resolvable:$true] %s2033
      %2036 = dma.vmem_to_hbm [thread:$0]  %s2034, 128, %s8, [#allocation8]
    $region61: #{tpu_custom_call.1} parent=1 // pred_fallthru
      _
    // Predicated region
    $region62: #{tpu_custom_call.1} parent=1 // pred_check
      _
    $region63: #{tpu_custom_call.1} parent=1 // pred_check_branch
      %2038 = sbr.rel (0) target = $region65
    $region64: #{tpu_custom_call.1} parent=1 // pred_region
      %2039 = dma.done [#allocation8], 128
    $region65: #{tpu_custom_call.1} parent=1 // pred_fallthru
      _
    %2040 = vsyncpa [#allocation7], 1
    %2041 = vsyncpa [#allocation10], 1
    %2042 = vsyncpa [#allocation13], 1
    %2043 = vsyncpa [#allocation8], 1

</llo_original>
